<compile_context>
chip_gen: v5e
topology: v5e:2x2
jax: 0.10.0
libtpu: 0.0.40
codegen_flags: <defaults>
</compile_context>

<pallas_src>
import jax
import jax.numpy as jnp
from jax.experimental import pallas as pl
from jax.experimental.pallas import tpu as pltpu

LATENT_DIM = 50            # fixed by the PyTorch module
H1, H2 = 1000, 100         # encoder/decoder hidden widths
H1_PAD, H2_PAD, L_PAD = 1024, 128, 128   # lane-aligned padded widths


def _round_up(n, m):
    return (n + m - 1) // m * m


def _leaky_relu(x, slope=0.01):
    # max(x, slope*x) == leaky_relu for 0 < slope < 1
    return jnp.maximum(x, slope * x)


def _softplus(x):
    # numerically stable softplus, matches F.softplus for moderate values
    return jnp.maximum(x, 0.0) + jnp.log1p(jnp.exp(-jnp.abs(x)))


# ----------------------------------------------------------------------------
# Kernel
# ----------------------------------------------------------------------------
def prior_vae_kernel(
    xt_ref, eps_ref,
    e1w_ref, e1b_ref, e2w_ref, e2b_ref, e3w_ref, e3b_ref,
    d1w_ref, d1b_ref, d2w_ref, d2b_ref, d3w_ref, d3b_ref,
    out_ref,
):
    f32 = jnp.float32
    bf16 = jnp.bfloat16

    # ---------------- Encoder ----------------
    h = jnp.dot(xt_ref[...], e1w_ref[...], preferred_element_type=f32) + e1b_ref[...]
    h = _leaky_relu(h)                                            # (TB, 1024) f32
    h = jnp.dot(h.astype(bf16), e2w_ref[...], preferred_element_type=f32) + e2b_ref[...]
    h = _leaky_relu(h)                                            # (TB, 128) f32
    # fused mu|log_var head: one 256-wide MXU pass, split at the vreg boundary
    h3 = jnp.dot(h.astype(bf16), e3w_ref[...], preferred_element_type=f32) + e3b_ref[...]
    mu = h3[:, :L_PAD]                                            # (TB, 128)
    log_var = h3[:, L_PAD:]                                       # (TB, 128)

    # ------------- Reparameterization (f32) -------------
    std = jnp.exp(0.5 * log_var)
    z = mu + eps_ref[...] * std                                   # pad cols: eps=0 -> z=0

    # ---------------- Decoder ----------------
    d = jnp.dot(z.astype(bf16), d1w_ref[...], preferred_element_type=f32) + d1b_ref[...]
    d = _leaky_relu(d)                                            # (TB, 128)
    d = jnp.dot(d.astype(bf16), d2w_ref[...], preferred_element_type=f32) + d2b_ref[...]
    d = _leaky_relu(d)                                            # (TB, 1024)
    d = jnp.dot(d.astype(bf16), d3w_ref[...], preferred_element_type=f32) + d3b_ref[...]
    out_ref[...] = _softplus(d)                                   # (TB, NIN_PAD) f32


# ----------------------------------------------------------------------------
# Host-side helpers
# ----------------------------------------------------------------------------
def _pad2d(a, rows, cols):
    out = jnp.zeros((rows, cols), a.dtype)
    return out.at[: a.shape[0], : a.shape[1]].set(a)


def prepare_params(params, n_features_trans):
    """One-time: zero-pad weights to lane multiples and cast to bf16.

    Do this ONCE per parameter set and reuse the result; it is out of the
    per-forward hot path."""
    n_inputs = params["d3w"].shape[1]
    assert params["e1w"].shape[0] == n_features_trans, \
        "enc1 input width must equal n_features_trans"
    nin_pad = _round_up(max(n_inputs, n_features_trans), 128)

    def wpad(w, r, c):
        return _pad2d(w, r, c).astype(jnp.bfloat16)   # MXU-native weights

    def bpad(b, c):
        return _pad2d(b, 1, c)                        # biases stay f32

    # fused enc3 weight/bias: [mu_head_padded_to_128 | logvar_head_padded_to_128]
    e3w = jnp.concatenate(
        [_pad2d(params["e3w"][:, :LATENT_DIM], H2_PAD, L_PAD),
         _pad2d(params["e3w"][:, LATENT_DIM:], H2_PAD, L_PAD)], axis=1
    ).astype(jnp.bfloat16)                            # (128, 256)
    e3b = jnp.concatenate(
        [_pad2d(params["e3b"][:, :LATENT_DIM], 1, L_PAD),
         _pad2d(params["e3b"][:, LATENT_DIM:], 1, L_PAD)], axis=1)   # (1, 256) f32

    prepared = {
        "e1w": wpad(params["e1w"], nin_pad, H1_PAD), "e1b": bpad(params["e1b"], H1_PAD),
        "e2w": wpad(params["e2w"], H1_PAD, H2_PAD),  "e2b": bpad(params["e2b"], H2_PAD),
        "e3w": e3w,                                  "e3b": e3b,
        "d1w": wpad(params["d1w"], L_PAD, H2_PAD),   "d1b": bpad(params["d1b"], H2_PAD),
        "d2w": wpad(params["d2w"], H2_PAD, H1_PAD),  "d2b": bpad(params["d2b"], H1_PAD),
        "d3w": wpad(params["d3w"], H1_PAD, nin_pad), "d3b": bpad(params["d3b"], nin_pad),
        "nin_pad": nin_pad,
        "n_inputs": n_inputs,
        "n_features_trans": n_features_trans,
    }
    return prepared


def _choose_batch_tile(B):
    """Batch tile (multiple of 16 for bf16 sublane packing) and padded batch.
    Mid-size batches get >=2 grid steps so megacore parts shard the batch axis."""
    if B <= 64:
        tb = _round_up(B, 16)
        return tb, tb
    if B <= 256:
        tb = _round_up(_round_up(B, 16) // 2, 16)
    else:
        tb = 256
    return tb, _round_up(B, tb)


_WEIGHT_KEYS = ("e1w", "e1b", "e2w", "e2b", "e3w", "e3b",
                "d1w", "d1b", "d2w", "d2b", "d3w", "d3b")


def prior_vae_forward(x, eps, prepared):
    """x: (B, D) with D >= n_features_trans + 3*n_features_path; only the first
    n_features_trans columns feed the encoder MLP.  eps: (B, LATENT_DIM)."""
    B = x.shape[0]
    nin_pad = prepared["nin_pad"]
    n_inputs = prepared["n_inputs"]
    nft = prepared["n_features_trans"]

    tb, b_pad = _choose_batch_tile(B)

    # per-call host prep is now just the activations (zero padding keeps math exact)
    xt = _pad2d(x[:, :nft], b_pad, nin_pad).astype(jnp.bfloat16)
    eps_p = _pad2d(eps, b_pad, L_PAD)                 # f32; pad cols 0 -> z pad cols 0

    wargs = tuple(prepared[k] for k in _WEIGHT_KEYS)

    def batch_spec(cols):
        return pl.BlockSpec((tb, cols), lambda i: (i, 0))

    def resident_spec(shape):
        # constant block index -> fetched once; single-buffered to halve weight VMEM
        return pl.BlockSpec(shape, lambda i: (0, 0),
                            pipeline_mode=pl.Buffered(buffer_count=1))

    in_specs = [batch_spec(nin_pad), batch_spec(L_PAD)] + \
               [resident_spec(a.shape) for a in wargs]

    out_pad = pl.pallas_call(
        prior_vae_kernel,
        out_shape=jax.ShapeDtypeStruct((b_pad, nin_pad), jnp.float32),
        grid=(b_pad // tb,),
        in_specs=in_specs,
        out_specs=batch_spec(nin_pad),
        compiler_params=pltpu.CompilerParams(
            dimension_semantics=("parallel",)),
    )(xt, eps_p, *wargs)

    return out_pad[:B, :n_inputs]


# ----------------------------------------------------------------------------
# Synthetic params + pure-JAX reference
# ----------------------------------------------------------------------------
def init_params(key, n_inputs):
    """Deterministic synthetic parameters, stored as (in, out) matrices, f32."""
    dims = [(n_inputs, H1), (H1, H2), (H2, 2 * LATENT_DIM),
            (LATENT_DIM, H2), (H2, H1), (H1, n_inputs)]
    names = ["e1", "e2", "e3", "d1", "d2", "d3"]
    params = {}
    keys = jax.random.split(key, 2 * len(names))
    for i, (name, (fin, fout)) in enumerate(zip(names, dims)):
        scale = 1.0 / jnp.sqrt(jnp.float32(fin))
        params[name + "w"] = scale * jax.random.normal(keys[2 * i], (fin, fout), jnp.float32)
        params[name + "b"] = scale * jax.random.normal(keys[2 * i + 1], (1, fout), jnp.float32)
    return params


def reference_forward(x, eps, params, n_features_trans):
    """Plain-JAX reference mirroring the kernel's bf16-operand / f32-accumulate math."""
    bf16, f32 = jnp.bfloat16, jnp.float32

    def lin(a, w, b):
        a = a.astype(bf16).astype(f32)
        w = w.astype(bf16).astype(f32)
        return jnp.dot(a, w) + b

    xt = x[:, :n_features_trans]
    h = _leaky_relu(lin(xt, params["e1w"], params["e1b"]))
    h = _leaky_relu(lin(h, params["e2w"], params["e2b"]))
    h3 = lin(h, params["e3w"], params["e3b"])
    mu, log_var = h3[:, :LATENT_DIM], h3[:, LATENT_DIM:]
    z = mu + eps * jnp.exp(0.5 * log_var)
    d = _leaky_relu(lin(z, params["d1w"], params["d1b"]))
    d = _leaky_relu(lin(d, params["d2w"], params["d2b"]))
    return _softplus(lin(d, params["d3w"], params["d3b"]))


if __name__ == "__main__":
    # small shapes consistent with the module: enc1(n_inputs, 1000) is applied to
    # x[:, :n_features_trans], so n_features_trans == n_inputs.
    batch = 4
    n_inputs = 16
    n_features_path = 8
    n_features_trans = n_inputs
    x_dim = n_features_trans + 3 * n_features_path   # 40 (prior mu/var/log_var columns)

    key = jax.random.PRNGKey(0)
    kx, keps, kp = jax.random.split(key, 3)
    x = jax.random.normal(kx, (batch, x_dim), jnp.float32)
    eps = jax.random.normal(keps, (batch, LATENT_DIM), jnp.float32)  # randn_like(std)
    params = init_params(kp, n_inputs)

    prepared = prepare_params(params, n_features_trans)   # one-time weight prep
    out = prior_vae_forward(x, eps, prepared)
    out = jax.block_until_ready(out)

    ref = reference_forward(x, eps, params, n_features_trans)
    assert out.shape == (batch, n_inputs)
    assert jnp.allclose(out, ref, atol=1e-2, rtol=1e-2), \
        f"max abs err {jnp.max(jnp.abs(out - ref))}"
    print("KERNEL_OK")
</pallas_src>

<mosaic_0001>
module attributes {stable_mosaic.version = 11 : i64} {
  func.func @prior_vae_kernel(%arg0: i32, %arg1: memref<16x128xbf16, #tpu.memory_space<vmem>>, %arg2: memref<16x128xf32, #tpu.memory_space<vmem>>, %arg3: memref<128x1024xbf16, #tpu.memory_space<vmem>>, %arg4: memref<1x1024xf32, #tpu.memory_space<vmem>>, %arg5: memref<1024x128xbf16, #tpu.memory_space<vmem>>, %arg6: memref<1x128xf32, #tpu.memory_space<vmem>>, %arg7: memref<128x256xbf16, #tpu.memory_space<vmem>>, %arg8: memref<1x256xf32, #tpu.memory_space<vmem>>, %arg9: memref<128x128xbf16, #tpu.memory_space<vmem>>, %arg10: memref<1x128xf32, #tpu.memory_space<vmem>>, %arg11: memref<128x1024xbf16, #tpu.memory_space<vmem>>, %arg12: memref<1x1024xf32, #tpu.memory_space<vmem>>, %arg13: memref<1024x128xbf16, #tpu.memory_space<vmem>>, %arg14: memref<1x128xf32, #tpu.memory_space<vmem>>, %arg15: memref<16x128xf32, #tpu.memory_space<vmem>>) attributes {dimension_semantics = [#tpu.dimension_semantics<parallel>], iteration_bounds = array<i64: 1>, scalar_prefetch = 0 : i64, scratch_operands = 0 : i64, tpu.core_type = #tpu.core_type<tc>, window_params = [{transform_indices = @transform_0, window_bounds = array<i64: 16, 128>}, {transform_indices = @transform_1, window_bounds = array<i64: 16, 128>}, {pipeline_mode = #tpu.pipeline_mode<synchronous>, transform_indices = @transform_2, window_bounds = array<i64: 128, 1024>}, {pipeline_mode = #tpu.pipeline_mode<synchronous>, transform_indices = @transform_3, window_bounds = array<i64: 1, 1024>}, {pipeline_mode = #tpu.pipeline_mode<synchronous>, transform_indices = @transform_4, window_bounds = array<i64: 1024, 128>}, {pipeline_mode = #tpu.pipeline_mode<synchronous>, transform_indices = @transform_5, window_bounds = array<i64: 1, 128>}, {pipeline_mode = #tpu.pipeline_mode<synchronous>, transform_indices = @transform_6, window_bounds = array<i64: 128, 256>}, {pipeline_mode = #tpu.pipeline_mode<synchronous>, transform_indices = @transform_7, window_bounds = array<i64: 1, 256>}, {pipeline_mode = #tpu.pipeline_mode<synchronous>, transform_indices = @transform_8, window_bounds = array<i64: 128, 128>}, {pipeline_mode = #tpu.pipeline_mode<synchronous>, transform_indices = @transform_9, window_bounds = array<i64: 1, 128>}, {pipeline_mode = #tpu.pipeline_mode<synchronous>, transform_indices = @transform_10, window_bounds = array<i64: 128, 1024>}, {pipeline_mode = #tpu.pipeline_mode<synchronous>, transform_indices = @transform_11, window_bounds = array<i64: 1, 1024>}, {pipeline_mode = #tpu.pipeline_mode<synchronous>, transform_indices = @transform_12, window_bounds = array<i64: 1024, 128>}, {pipeline_mode = #tpu.pipeline_mode<synchronous>, transform_indices = @transform_13, window_bounds = array<i64: 1, 128>}, {transform_indices = @transform_14, window_bounds = array<i64: 16, 128>}]} {
    %c0 = arith.constant 0 : index
    %c0_0 = arith.constant 0 : index
    %0 = vector.load %arg1[%c0, %c0_0] : memref<16x128xbf16, #tpu.memory_space<vmem>>, vector<16x128xbf16>
    %c0_1 = arith.constant 0 : index
    %c0_2 = arith.constant 0 : index
    %1 = vector.load %arg3[%c0_1, %c0_2] : memref<128x1024xbf16, #tpu.memory_space<vmem>>, vector<128x1024xbf16>
    %cst = arith.constant dense<0.000000e+00> : vector<16x1024xf32>
    %2 = tpu.matmul %0, %1, %cst {dimension_numbers = #tpu.dot_dimension_numbers<[1], [0], [0], [1], [0, 0, 1, 1], [], []>} : vector<16x128xbf16>, vector<128x1024xbf16>, vector<16x1024xf32> -> vector<16x1024xf32>
    %c0_3 = arith.constant 0 : index
    %c0_4 = arith.constant 0 : index
    %3 = vector.load %arg4[%c0_3, %c0_4] : memref<1x1024xf32, #tpu.memory_space<vmem>>, vector<1x1024xf32>
    %4 = vector.broadcast %3 : vector<1x1024xf32> to vector<16x1024xf32>
    %5 = arith.addf %2, %4 : vector<16x1024xf32>
    %cst_5 = arith.constant 0.00999999977 : f32
    %6 = vector.broadcast %cst_5 : f32 to vector<16x1024xf32>
    %7 = arith.mulf %6, %5 : vector<16x1024xf32>
    %8 = arith.maximumf %5, %7 : vector<16x1024xf32>
    %9 = arith.truncf %8 : vector<16x1024xf32> to vector<16x1024xbf16>
    %c0_6 = arith.constant 0 : index
    %c0_7 = arith.constant 0 : index
    %10 = vector.load %arg5[%c0_6, %c0_7] : memref<1024x128xbf16, #tpu.memory_space<vmem>>, vector<1024x128xbf16>
    %cst_8 = arith.constant dense<0.000000e+00> : vector<16x128xf32>
    %11 = tpu.matmul %9, %10, %cst_8 {dimension_numbers = #tpu.dot_dimension_numbers<[1], [0], [0], [1], [0, 0, 1, 1], [], []>} : vector<16x1024xbf16>, vector<1024x128xbf16>, vector<16x128xf32> -> vector<16x128xf32>
    %c0_9 = arith.constant 0 : index
    %c0_10 = arith.constant 0 : index
    %12 = vector.load %arg6[%c0_9, %c0_10] : memref<1x128xf32, #tpu.memory_space<vmem>>, vector<1x128xf32>
    %13 = vector.broadcast %12 : vector<1x128xf32> to vector<16x128xf32>
    %14 = arith.addf %11, %13 : vector<16x128xf32>
    %cst_11 = arith.constant 0.00999999977 : f32
    %15 = vector.broadcast %cst_11 : f32 to vector<16x128xf32>
    %16 = arith.mulf %15, %14 : vector<16x128xf32>
    %17 = arith.maximumf %14, %16 : vector<16x128xf32>
    %18 = arith.truncf %17 : vector<16x128xf32> to vector<16x128xbf16>
    %c0_12 = arith.constant 0 : index
    %c0_13 = arith.constant 0 : index
    %19 = vector.load %arg7[%c0_12, %c0_13] : memref<128x256xbf16, #tpu.memory_space<vmem>>, vector<128x256xbf16>
    %cst_14 = arith.constant dense<0.000000e+00> : vector<16x256xf32>
    %20 = tpu.matmul %18, %19, %cst_14 {dimension_numbers = #tpu.dot_dimension_numbers<[1], [0], [0], [1], [0, 0, 1, 1], [], []>} : vector<16x128xbf16>, vector<128x256xbf16>, vector<16x256xf32> -> vector<16x256xf32>
    %c0_15 = arith.constant 0 : index
    %c0_16 = arith.constant 0 : index
    %21 = vector.load %arg8[%c0_15, %c0_16] : memref<1x256xf32, #tpu.memory_space<vmem>>, vector<1x256xf32>
    %22 = vector.broadcast %21 : vector<1x256xf32> to vector<16x256xf32>
    %23 = arith.addf %20, %22 : vector<16x256xf32>
    %24 = vector.extract_strided_slice %23 {offsets = [0, 0], sizes = [16, 128], strides = [1, 1]} : vector<16x256xf32> to vector<16x128xf32>
    %25 = vector.extract_strided_slice %23 {offsets = [0, 128], sizes = [16, 128], strides = [1, 1]} : vector<16x256xf32> to vector<16x128xf32>
    %cst_17 = arith.constant 5.000000e-01 : f32
    %26 = vector.broadcast %cst_17 : f32 to vector<16x128xf32>
    %27 = arith.mulf %26, %25 : vector<16x128xf32>
    %28 = math.exp %27 : vector<16x128xf32>
    %c0_18 = arith.constant 0 : index
    %c0_19 = arith.constant 0 : index
    %29 = vector.load %arg2[%c0_18, %c0_19] : memref<16x128xf32, #tpu.memory_space<vmem>>, vector<16x128xf32>
    %30 = arith.mulf %29, %28 : vector<16x128xf32>
    %31 = arith.addf %24, %30 : vector<16x128xf32>
    %32 = arith.truncf %31 : vector<16x128xf32> to vector<16x128xbf16>
    %c0_20 = arith.constant 0 : index
    %c0_21 = arith.constant 0 : index
    %33 = vector.load %arg9[%c0_20, %c0_21] : memref<128x128xbf16, #tpu.memory_space<vmem>>, vector<128x128xbf16>
    %cst_22 = arith.constant dense<0.000000e+00> : vector<16x128xf32>
    %34 = tpu.matmul %32, %33, %cst_22 {dimension_numbers = #tpu.dot_dimension_numbers<[1], [0], [0], [1], [0, 0, 1, 1], [], []>} : vector<16x128xbf16>, vector<128x128xbf16>, vector<16x128xf32> -> vector<16x128xf32>
    %c0_23 = arith.constant 0 : index
    %c0_24 = arith.constant 0 : index
    %35 = vector.load %arg10[%c0_23, %c0_24] : memref<1x128xf32, #tpu.memory_space<vmem>>, vector<1x128xf32>
    %36 = vector.broadcast %35 : vector<1x128xf32> to vector<16x128xf32>
    %37 = arith.addf %34, %36 : vector<16x128xf32>
    %cst_25 = arith.constant 0.00999999977 : f32
    %38 = vector.broadcast %cst_25 : f32 to vector<16x128xf32>
    %39 = arith.mulf %38, %37 : vector<16x128xf32>
    %40 = arith.maximumf %37, %39 : vector<16x128xf32>
    %41 = arith.truncf %40 : vector<16x128xf32> to vector<16x128xbf16>
    %c0_26 = arith.constant 0 : index
    %c0_27 = arith.constant 0 : index
    %42 = vector.load %arg11[%c0_26, %c0_27] : memref<128x1024xbf16, #tpu.memory_space<vmem>>, vector<128x1024xbf16>
    %cst_28 = arith.constant dense<0.000000e+00> : vector<16x1024xf32>
    %43 = tpu.matmul %41, %42, %cst_28 {dimension_numbers = #tpu.dot_dimension_numbers<[1], [0], [0], [1], [0, 0, 1, 1], [], []>} : vector<16x128xbf16>, vector<128x1024xbf16>, vector<16x1024xf32> -> vector<16x1024xf32>
    %c0_29 = arith.constant 0 : index
    %c0_30 = arith.constant 0 : index
    %44 = vector.load %arg12[%c0_29, %c0_30] : memref<1x1024xf32, #tpu.memory_space<vmem>>, vector<1x1024xf32>
    %45 = vector.broadcast %44 : vector<1x1024xf32> to vector<16x1024xf32>
    %46 = arith.addf %43, %45 : vector<16x1024xf32>
    %cst_31 = arith.constant 0.00999999977 : f32
    %47 = vector.broadcast %cst_31 : f32 to vector<16x1024xf32>
    %48 = arith.mulf %47, %46 : vector<16x1024xf32>
    %49 = arith.maximumf %46, %48 : vector<16x1024xf32>
    %50 = arith.truncf %49 : vector<16x1024xf32> to vector<16x1024xbf16>
    %c0_32 = arith.constant 0 : index
    %c0_33 = arith.constant 0 : index
    %51 = vector.load %arg13[%c0_32, %c0_33] : memref<1024x128xbf16, #tpu.memory_space<vmem>>, vector<1024x128xbf16>
    %cst_34 = arith.constant dense<0.000000e+00> : vector<16x128xf32>
    %52 = tpu.matmul %50, %51, %cst_34 {dimension_numbers = #tpu.dot_dimension_numbers<[1], [0], [0], [1], [0, 0, 1, 1], [], []>} : vector<16x1024xbf16>, vector<1024x128xbf16>, vector<16x128xf32> -> vector<16x128xf32>
    %c0_35 = arith.constant 0 : index
    %c0_36 = arith.constant 0 : index
    %53 = vector.load %arg14[%c0_35, %c0_36] : memref<1x128xf32, #tpu.memory_space<vmem>>, vector<1x128xf32>
    %54 = vector.broadcast %53 : vector<1x128xf32> to vector<16x128xf32>
    %55 = arith.addf %52, %54 : vector<16x128xf32>
    %cst_37 = arith.constant 0.000000e+00 : f32
    %56 = vector.broadcast %cst_37 : f32 to vector<16x128xf32>
    %57 = arith.maximumf %55, %56 : vector<16x128xf32>
    %58 = math.absf %55 : vector<16x128xf32>
    %cst_38 = arith.constant 0.000000e+00 : f32
    %59 = vector.broadcast %cst_38 : f32 to vector<16x128xf32>
    %60 = arith.subf %59, %58 : vector<16x128xf32>
    %61 = math.exp %60 : vector<16x128xf32>
    %62 = math.log1p %61 : vector<16x128xf32>
    %63 = arith.addf %57, %62 : vector<16x128xf32>
    %c0_39 = arith.constant 0 : index
    %c0_40 = arith.constant 0 : index
    %64 = vector.load %arg15[%c0_39, %c0_40] : memref<16x128xf32, #tpu.memory_space<vmem>>, vector<16x128xf32>
    tpu.vector_store %arg15[%c0_39, %c0_40], %63 {strides = array<i32>} : memref<16x128xf32, #tpu.memory_space<vmem>>, vector<16x128xf32>,
    return
  }
  func.func @transform_0(%arg0: i32) -> (i32, i32) {
    %c0_i32 = arith.constant 0 : i32
    %c0_i32_0 = arith.constant 0 : i32
    return %arg0, %c0_i32 : i32, i32
  }
  func.func @transform_1(%arg0: i32) -> (i32, i32) {
    %c0_i32 = arith.constant 0 : i32
    %c0_i32_0 = arith.constant 0 : i32
    return %arg0, %c0_i32 : i32, i32
  }
  func.func @transform_2(%arg0: i32) -> (i32, i32) {
    %c0_i32 = arith.constant 0 : i32
    %c0_i32_0 = arith.constant 0 : i32
    %c0_i32_1 = arith.constant 0 : i32
    return %c0_i32, %c0_i32_0 : i32, i32
  }
  func.func @transform_3(%arg0: i32) -> (i32, i32) {
    %c0_i32 = arith.constant 0 : i32
    %c0_i32_0 = arith.constant 0 : i32
    %c0_i32_1 = arith.constant 0 : i32
    return %c0_i32, %c0_i32_0 : i32, i32
  }
  func.func @transform_4(%arg0: i32) -> (i32, i32) {
    %c0_i32 = arith.constant 0 : i32
    %c0_i32_0 = arith.constant 0 : i32
    %c0_i32_1 = arith.constant 0 : i32
    return %c0_i32, %c0_i32_0 : i32, i32
  }
  func.func @transform_5(%arg0: i32) -> (i32, i32) {
    %c0_i32 = arith.constant 0 : i32
    %c0_i32_0 = arith.constant 0 : i32
    %c0_i32_1 = arith.constant 0 : i32
    return %c0_i32, %c0_i32_0 : i32, i32
  }
  func.func @transform_6(%arg0: i32) -> (i32, i32) {
    %c0_i32 = arith.constant 0 : i32
    %c0_i32_0 = arith.constant 0 : i32
    %c0_i32_1 = arith.constant 0 : i32
    return %c0_i32, %c0_i32_0 : i32, i32
  }
  func.func @transform_7(%arg0: i32) -> (i32, i32) {
    %c0_i32 = arith.constant 0 : i32
    %c0_i32_0 = arith.constant 0 : i32
    %c0_i32_1 = arith.constant 0 : i32
    return %c0_i32, %c0_i32_0 : i32, i32
  }
  func.func @transform_8(%arg0: i32) -> (i32, i32) {
    %c0_i32 = arith.constant 0 : i32
    %c0_i32_0 = arith.constant 0 : i32
    %c0_i32_1 = arith.constant 0 : i32
    return %c0_i32, %c0_i32_0 : i32, i32
  }
  func.func @transform_9(%arg0: i32) -> (i32, i32) {
    %c0_i32 = arith.constant 0 : i32
    %c0_i32_0 = arith.constant 0 : i32
    %c0_i32_1 = arith.constant 0 : i32
    return %c0_i32, %c0_i32_0 : i32, i32
  }
  func.func @transform_10(%arg0: i32) -> (i32, i32) {
    %c0_i32 = arith.constant 0 : i32
    %c0_i32_0 = arith.constant 0 : i32
    %c0_i32_1 = arith.constant 0 : i32
    return %c0_i32, %c0_i32_0 : i32, i32
  }
  func.func @transform_11(%arg0: i32) -> (i32, i32) {
    %c0_i32 = arith.constant 0 : i32
    %c0_i32_0 = arith.constant 0 : i32
    %c0_i32_1 = arith.constant 0 : i32
    return %c0_i32, %c0_i32_0 : i32, i32
  }
  func.func @transform_12(%arg0: i32) -> (i32, i32) {
    %c0_i32 = arith.constant 0 : i32
    %c0_i32_0 = arith.constant 0 : i32
    %c0_i32_1 = arith.constant 0 : i32
    return %c0_i32, %c0_i32_0 : i32, i32
  }
  func.func @transform_13(%arg0: i32) -> (i32, i32) {
    %c0_i32 = arith.constant 0 : i32
    %c0_i32_0 = arith.constant 0 : i32
    %c0_i32_1 = arith.constant 0 : i32
    return %c0_i32, %c0_i32_0 : i32, i32
  }
  func.func @transform_14(%arg0: i32) -> (i32, i32) {
    %c0_i32 = arith.constant 0 : i32
    %c0_i32_0 = arith.constant 0 : i32
    return %arg0, %c0_i32 : i32, i32
  }
}

</mosaic_0001>

<llo_original>
// kernel: tpu_custom_call.1
$region0: #{tpu_custom_call.1}
  #allocation0 [shape = 'u32[]', space=smem, size = 0x4, offset = 0x4, fixed_abs, tag = 'smem constant byte address 0x4 - core index']
  #allocation1 [shape = 'u32[72,128]{1,0:T(1,128)}', space=vmem, size = 0x9000, scoped, tag = 'internal scratch']
  %s0 = inlined_call_operand.hbm [shape: bf16[16,128], index: 0, kind: input, shape index: {}]
  %s1 = inlined_call_operand.hbm [shape: f32[16,128], index: 1, kind: input, shape index: {}]
  %s2 = inlined_call_operand.hbm [shape: bf16[128,1024], index: 2, kind: input, shape index: {}]
  %s3 = inlined_call_operand.hbm [shape: f32[1,1024], index: 3, kind: input, shape index: {}]
  %s4 = inlined_call_operand.hbm [shape: bf16[1024,128], index: 4, kind: input, shape index: {}]
  %s5 = inlined_call_operand.hbm [shape: f32[1,128], index: 5, kind: input, shape index: {}]
  %s6 = inlined_call_operand.hbm [shape: bf16[128,256], index: 6, kind: input, shape index: {}]
  %s7 = inlined_call_operand.vmem [shape: f32[1,256], index: 7, kind: input, shape index: {}]
  %s8 = inlined_call_operand.hbm [shape: bf16[128,128], index: 8, kind: input, shape index: {}]
  %s9 = inlined_call_operand.hbm [shape: f32[1,128], index: 9, kind: input, shape index: {}]
  %s10 = inlined_call_operand.hbm [shape: bf16[128,1024], index: 10, kind: input, shape index: {}]
  %s11 = inlined_call_operand.vmem [shape: f32[1,1024], index: 11, kind: input, shape index: {}]
  %s12 = inlined_call_operand.hbm [shape: bf16[1024,128], index: 12, kind: input, shape index: {}]
  %s13 = inlined_call_operand.vmem [shape: f32[1,128], index: 13, kind: input, shape index: {}]
  %s14 = inlined_call_operand.hbm [shape: f32[16,128], index: 14, kind: output, shape index: {}]
  %s15 = sld [smem:[#allocation0]]
  $region110: #{tpu_custom_call.1} parent=0
    _
  %s17 = ssub.s32 1, %s15
  %s18 = scalar_select 0, %s17, %s15
  $region1: #{tpu_custom_call.1} parent=0
    #allocation2 [shape = 'u8[4096]{0}', space=vmem, size = 0x1000, scoped, tag = 'input window, operand 0, single buffered']
    #allocation3 [shape = 's32[1]{0}', space=sflag, size = 0x4, scoped, tag = 'scoped memory for tpu_custom_call.1']
    #allocation4 [shape = 's32[1]{0}', space=sflag, size = 0x4, scoped, tag = 'scoped memory for tpu_custom_call.1']
    #allocation5 [shape = 'u8[8192]{0}', space=vmem, size = 0x2000, scoped, tag = 'input window, operand 1, single buffered']
    #allocation6 [shape = 's32[1]{0}', space=sflag, size = 0x4, scoped, tag = 'scoped memory for tpu_custom_call.1']
    #allocation7 [shape = 'u8[262144]{0}', space=vmem, size = 0x40000, scoped, tag = 'input window, operand 2, single buffered']
    #allocation8 [shape = 'u8[4096]{0}', space=vmem, size = 0x1000, scoped, tag = 'input window, operand 3, single buffered']
    #allocation9 [shape = 's32[1]{0}', space=sflag, size = 0x4, scoped, tag = 'scoped memory for tpu_custom_call.1']
    #allocation10 [shape = 'u8[262144]{0}', space=vmem, size = 0x40000, scoped, tag = 'input window, operand 4, single buffered']
    #allocation11 [shape = 'u8[512]{0}', space=vmem, size = 0x400, scoped, tag = 'input window, operand 5, single buffered']
    #allocation12 [shape = 's32[1]{0}', space=sflag, size = 0x4, scoped, tag = 'scoped memory for tpu_custom_call.1']
    #allocation13 [shape = 'u8[65536]{0}', space=vmem, size = 0x10000, scoped, tag = 'input window, operand 6, single buffered']
    #allocation14 [shape = 'u8[32768]{0}', space=vmem, size = 0x8000, scoped, tag = 'input window, operand 8, single buffered']
    #allocation15 [shape = 's32[1]{0}', space=sflag, size = 0x4, scoped, tag = 'scoped memory for tpu_custom_call.1']
    #allocation16 [shape = 'u8[512]{0}', space=vmem, size = 0x400, scoped, tag = 'input window, operand 9, single buffered']
    #allocation17 [shape = 'u8[262144]{0}', space=vmem, size = 0x40000, scoped, tag = 'input window, operand 10, single buffered']
    #allocation18 [shape = 's32[1]{0}', space=sflag, size = 0x4, scoped, tag = 'scoped memory for tpu_custom_call.1']
    #allocation19 [shape = 'u8[262144]{0}', space=vmem, size = 0x40000, scoped, tag = 'input window, operand 12, single buffered']
    #allocation20 [shape = 'u8[8192]{0}', space=vmem, size = 0x2000, scoped, tag = 'output window, operand 0, single buffered']
    %19 = vsyncpa [#allocation3], 0
    %20 = vsyncpa [#allocation6], 0
    %21 = vsyncpa [#allocation9], 0
    %22 = vsyncpa [#allocation12], 0
    %23 = vsyncpa [#allocation15], 0
    %24 = vsyncpa [#allocation18], 0
    %25 = vsyncpa [#allocation4], 0
    // Predicated region
    $region2: #{tpu_custom_call.1} parent=1 // pred_check
      _
    $region3: #{tpu_custom_call.1} parent=1 // pred_check_branch
      %27 = sbr.rel (0) target = $region5
    $region4: #{tpu_custom_call.1} parent=1 // pred_region
      %29 = vsyncadd [#allocation3], 0
      %s30 = sshll.u32 %s0, 4
      %s31 = int_to_ptr.hbm [resolvable:$true] %s30
      %s32 = sshll.u32 [#allocation2], 4
      %s33 = int_to_ptr.vmem [resolvable:$true] %s32
      %38 = dma.hbm_to_vmem [thread:$0]  %s31, 128, %s33, [#allocation3], 64, 64, 4
    $region5: #{tpu_custom_call.1} parent=1 // pred_fallthru
      _
    // Predicated region
    $region6: #{tpu_custom_call.1} parent=1 // pred_check
      _
    $region7: #{tpu_custom_call.1} parent=1 // pred_check_branch
      %40 = sbr.rel (0) target = $region9
    $region8: #{tpu_custom_call.1} parent=1 // pred_region
      %42 = vsyncadd [#allocation6], 0
      %s43 = sshll.u32 %s1, 4
      %s44 = int_to_ptr.hbm [resolvable:$true] %s43
      %s45 = sshll.u32 [#allocation5], 4
      %s46 = int_to_ptr.vmem [resolvable:$true] %s45
      %51 = dma.hbm_to_vmem [thread:$0]  %s44, 256, %s46, [#allocation6], 128, 128, 8
    $region9: #{tpu_custom_call.1} parent=1 // pred_fallthru
      _
    // Predicated region
    $region10: #{tpu_custom_call.1} parent=1 // pred_check
      _
    $region11: #{tpu_custom_call.1} parent=1 // pred_check_branch
      %53 = sbr.rel (0) target = $region13
    $region12: #{tpu_custom_call.1} parent=1 // pred_region
      %55 = vsyncadd [#allocation6], 0
      %s56 = sshll.u32 %s2, 4
      %s57 = int_to_ptr.hbm [resolvable:$true] %s56
      %s58 = sshll.u32 [#allocation7], 4
      %s59 = int_to_ptr.vmem [resolvable:$true] %s58
      %64 = dma.hbm_to_vmem [thread:$0]  %s57, 8192, %s59, [#allocation6], 512, 512, 32
    $region13: #{tpu_custom_call.1} parent=1 // pred_fallthru
      _
    // Predicated region
    $region14: #{tpu_custom_call.1} parent=1 // pred_check
      _
    $region15: #{tpu_custom_call.1} parent=1 // pred_check_branch
      %66 = sbr.rel (0) target = $region17
    $region16: #{tpu_custom_call.1} parent=1 // pred_region
      %68 = vsyncadd [#allocation9], 0
      %s70 = sshll.u32 %s3, 4
      %s71 = int_to_ptr.hbm [resolvable:$true] %s70
      %s72 = sshll.u32 [#allocation8], 4
      %s73 = int_to_ptr.vmem [resolvable:$true] %s72
      %75 = dma.hbm_to_vmem [thread:$0]  %s71, 128, %s73, [#allocation9]
    $region17: #{tpu_custom_call.1} parent=1 // pred_fallthru
      _
    // Predicated region
    $region18: #{tpu_custom_call.1} parent=1 // pred_check
      _
    $region19: #{tpu_custom_call.1} parent=1 // pred_check_branch
      %77 = sbr.rel (0) target = $region21
    $region20: #{tpu_custom_call.1} parent=1 // pred_region
      %79 = vsyncadd [#allocation9], 0
      %s80 = sshll.u32 %s4, 4
      %s81 = int_to_ptr.hbm [resolvable:$true] %s80
      %s82 = sshll.u32 [#allocation10], 4
      %s83 = int_to_ptr.vmem [resolvable:$true] %s82
      %88 = dma.hbm_to_vmem [thread:$0]  %s81, 8192, %s83, [#allocation9], 64, 64, 4
    $region21: #{tpu_custom_call.1} parent=1 // pred_fallthru
      _
    // Predicated region
    $region22: #{tpu_custom_call.1} parent=1 // pred_check
      _
    $region23: #{tpu_custom_call.1} parent=1 // pred_check_branch
      %90 = sbr.rel (0) target = $region25
    $region24: #{tpu_custom_call.1} parent=1 // pred_region
      %92 = vsyncadd [#allocation12], 0
      %s94 = sshll.u32 %s5, 4
      %s95 = int_to_ptr.hbm [resolvable:$true] %s94
      %s96 = sshll.u32 [#allocation11], 4
      %s97 = int_to_ptr.vmem [resolvable:$true] %s96
      %99 = dma.hbm_to_vmem [thread:$0]  %s95, 16, %s97, [#allocation12]
    $region25: #{tpu_custom_call.1} parent=1 // pred_fallthru
      _
    // Predicated region
    $region26: #{tpu_custom_call.1} parent=1 // pred_check
      _
    $region27: #{tpu_custom_call.1} parent=1 // pred_check_branch
      %101 = sbr.rel (0) target = $region29
    $region28: #{tpu_custom_call.1} parent=1 // pred_region
      %103 = vsyncadd [#allocation12], 0
      %s104 = sshll.u32 %s6, 4
      %s105 = int_to_ptr.hbm [resolvable:$true] %s104
      %s106 = sshll.u32 [#allocation13], 4
      %s107 = int_to_ptr.vmem [resolvable:$true] %s106
      %112 = dma.hbm_to_vmem [thread:$0]  %s105, 2048, %s107, [#allocation12], 128, 128, 8
    $region29: #{tpu_custom_call.1} parent=1 // pred_fallthru
      _
    // Predicated region
    $region30: #{tpu_custom_call.1} parent=1 // pred_check
      _
    $region31: #{tpu_custom_call.1} parent=1 // pred_check_branch
      %114 = sbr.rel (0) target = $region33
    $region32: #{tpu_custom_call.1} parent=1 // pred_region
      _
    $region33: #{tpu_custom_call.1} parent=1 // pred_fallthru
      _
    // Predicated region
    $region34: #{tpu_custom_call.1} parent=1 // pred_check
      _
    $region35: #{tpu_custom_call.1} parent=1 // pred_check_branch
      %116 = sbr.rel (0) target = $region37
    $region36: #{tpu_custom_call.1} parent=1 // pred_region
      %118 = vsyncadd [#allocation15], 0
      %s119 = sshll.u32 %s8, 4
      %s120 = int_to_ptr.hbm [resolvable:$true] %s119
      %s121 = sshll.u32 [#allocation14], 4
      %s122 = int_to_ptr.vmem [resolvable:$true] %s121
      %127 = dma.hbm_to_vmem [thread:$0]  %s120, 1024, %s122, [#allocation15], 64, 64, 4
    $region37: #{tpu_custom_call.1} parent=1 // pred_fallthru
      _
    // Predicated region
    $region38: #{tpu_custom_call.1} parent=1 // pred_check
      _
    $region39: #{tpu_custom_call.1} parent=1 // pred_check_branch
      %129 = sbr.rel (0) target = $region41
    $region40: #{tpu_custom_call.1} parent=1 // pred_region
      %131 = vsyncadd [#allocation15], 0
      %s133 = sshll.u32 %s9, 4
      %s134 = int_to_ptr.hbm [resolvable:$true] %s133
      %s135 = sshll.u32 [#allocation16], 4
      %s136 = int_to_ptr.vmem [resolvable:$true] %s135
      %138 = dma.hbm_to_vmem [thread:$0]  %s134, 16, %s136, [#allocation15]
    $region41: #{tpu_custom_call.1} parent=1 // pred_fallthru
      _
    // Predicated region
    $region42: #{tpu_custom_call.1} parent=1 // pred_check
      _
    $region43: #{tpu_custom_call.1} parent=1 // pred_check_branch
      %140 = sbr.rel (0) target = $region45
    $region44: #{tpu_custom_call.1} parent=1 // pred_region
      %142 = vsyncadd [#allocation18], 0
      %s143 = sshll.u32 %s10, 4
      %s144 = int_to_ptr.hbm [resolvable:$true] %s143
      %s145 = sshll.u32 [#allocation17], 4
      %s146 = int_to_ptr.vmem [resolvable:$true] %s145
      %151 = dma.hbm_to_vmem [thread:$0]  %s144, 8192, %s146, [#allocation18], 512, 512, 32
    $region45: #{tpu_custom_call.1} parent=1 // pred_fallthru
      _
    // Predicated region
    $region46: #{tpu_custom_call.1} parent=1 // pred_check
      _
    $region47: #{tpu_custom_call.1} parent=1 // pred_check_branch
      %153 = sbr.rel (0) target = $region49
    $region48: #{tpu_custom_call.1} parent=1 // pred_region
      _
    $region49: #{tpu_custom_call.1} parent=1 // pred_fallthru
      _
    // Predicated region
    $region50: #{tpu_custom_call.1} parent=1 // pred_check
      _
    $region51: #{tpu_custom_call.1} parent=1 // pred_check_branch
      %155 = sbr.rel (0) target = $region53
    $region52: #{tpu_custom_call.1} parent=1 // pred_region
      %157 = vsyncadd [#allocation18], 0
      %s158 = sshll.u32 %s12, 4
      %s159 = int_to_ptr.hbm [resolvable:$true] %s158
      %s160 = sshll.u32 [#allocation19], 4
      %s161 = int_to_ptr.vmem [resolvable:$true] %s160
      %166 = dma.hbm_to_vmem [thread:$0]  %s159, 8192, %s161, [#allocation18], 64, 64, 4
    $region53: #{tpu_custom_call.1} parent=1 // pred_fallthru
      _
    // Predicated region
    $region54: #{tpu_custom_call.1} parent=1 // pred_check
      _
    $region55: #{tpu_custom_call.1} parent=1 // pred_check_branch
      %168 = sbr.rel (0) target = $region57
    $region56: #{tpu_custom_call.1} parent=1 // pred_region
      _
    $region57: #{tpu_custom_call.1} parent=1 // pred_fallthru
      _
    // Predicated region
    $region58: #{tpu_custom_call.1} parent=1 // pred_check
      _
    $region59: #{tpu_custom_call.1} parent=1 // pred_check_branch
      %170 = sbr.rel (0) target = $region61
    $region60: #{tpu_custom_call.1} parent=1 // pred_region
      %172 = dma.done [#allocation3], 128
    $region61: #{tpu_custom_call.1} parent=1 // pred_fallthru
      _
    // Predicated region
    $region62: #{tpu_custom_call.1} parent=1 // pred_check
      _
    $region63: #{tpu_custom_call.1} parent=1 // pred_check_branch
      %174 = sbr.rel (0) target = $region65
    $region64: #{tpu_custom_call.1} parent=1 // pred_region
      %176 = dma.done [#allocation6], 256
    $region65: #{tpu_custom_call.1} parent=1 // pred_fallthru
      _
    // Predicated region
    $region66: #{tpu_custom_call.1} parent=1 // pred_check
      _
    $region67: #{tpu_custom_call.1} parent=1 // pred_check_branch
      %178 = sbr.rel (0) target = $region69
    $region68: #{tpu_custom_call.1} parent=1 // pred_region
      %180 = dma.done [#allocation6], 8192
    $region69: #{tpu_custom_call.1} parent=1 // pred_fallthru
      _
    // Predicated region
    $region70: #{tpu_custom_call.1} parent=1 // pred_check
      _
    $region71: #{tpu_custom_call.1} parent=1 // pred_check_branch
      %182 = sbr.rel (0) target = $region73
    $region72: #{tpu_custom_call.1} parent=1 // pred_region
      %184 = dma.done [#allocation9], 128
    $region73: #{tpu_custom_call.1} parent=1 // pred_fallthru
      _
    // Predicated region
    $region74: #{tpu_custom_call.1} parent=1 // pred_check
      _
    $region75: #{tpu_custom_call.1} parent=1 // pred_check_branch
      %186 = sbr.rel (0) target = $region77
    $region76: #{tpu_custom_call.1} parent=1 // pred_region
      %188 = dma.done [#allocation9], 8192
    $region77: #{tpu_custom_call.1} parent=1 // pred_fallthru
      _
    // Predicated region
    $region78: #{tpu_custom_call.1} parent=1 // pred_check
      _
    $region79: #{tpu_custom_call.1} parent=1 // pred_check_branch
      %190 = sbr.rel (0) target = $region81
    $region80: #{tpu_custom_call.1} parent=1 // pred_region
      %192 = dma.done [#allocation12], 16
    $region81: #{tpu_custom_call.1} parent=1 // pred_fallthru
      _
    // Predicated region
    $region82: #{tpu_custom_call.1} parent=1 // pred_check
      _
    $region83: #{tpu_custom_call.1} parent=1 // pred_check_branch
      %194 = sbr.rel (0) target = $region85
    $region84: #{tpu_custom_call.1} parent=1 // pred_region
      %196 = dma.done [#allocation12], 2048
    $region85: #{tpu_custom_call.1} parent=1 // pred_fallthru
      _
    // Predicated region
    $region86: #{tpu_custom_call.1} parent=1 // pred_check
      _
    $region87: #{tpu_custom_call.1} parent=1 // pred_check_branch
      %198 = sbr.rel (0) target = $region89
    $region88: #{tpu_custom_call.1} parent=1 // pred_region
      %200 = dma.done [#allocation15], 1024
    $region89: #{tpu_custom_call.1} parent=1 // pred_fallthru
      _
    // Predicated region
    $region90: #{tpu_custom_call.1} parent=1 // pred_check
      _
    $region91: #{tpu_custom_call.1} parent=1 // pred_check_branch
      %202 = sbr.rel (0) target = $region93
    $region92: #{tpu_custom_call.1} parent=1 // pred_region
      %204 = dma.done [#allocation15], 16
    $region93: #{tpu_custom_call.1} parent=1 // pred_fallthru
      _
    // Predicated region
    $region94: #{tpu_custom_call.1} parent=1 // pred_check
      _
    $region95: #{tpu_custom_call.1} parent=1 // pred_check_branch
      %206 = sbr.rel (0) target = $region97
    $region96: #{tpu_custom_call.1} parent=1 // pred_region
      %208 = dma.done [#allocation18], 8192
    $region97: #{tpu_custom_call.1} parent=1 // pred_fallthru
      _
    // Predicated region
    $region98: #{tpu_custom_call.1} parent=1 // pred_check
      _
    $region99: #{tpu_custom_call.1} parent=1 // pred_check_branch
      %210 = sbr.rel (0) target = $region101
    $region100: #{tpu_custom_call.1} parent=1 // pred_region
      %212 = dma.done [#allocation18], 8192
    $region101: #{tpu_custom_call.1} parent=1 // pred_fallthru
      _
    %v213 = vld [vmem:[#allocation2] sm:$0xf]
    %v214 = vld [vmem:[#allocation2 + $0x4] sm:$0xf]
    %v215 = vld [vmem:[#allocation7] sm:$0xff]
    %v216 = vld [vmem:[#allocation7 + $0x8] sm:$0xff]
    %v217 = vld [vmem:[#allocation7 + $0x10] sm:$0xff]
    %v218 = vld [vmem:[#allocation7 + $0x18] sm:$0xff]
    %v219 = vld [vmem:[#allocation7 + $0x20] sm:$0xff]
    %v220 = vld [vmem:[#allocation7 + $0x28] sm:$0xff]
    %v221 = vld [vmem:[#allocation7 + $0x30] sm:$0xff]
    %v222 = vld [vmem:[#allocation7 + $0x38] sm:$0xff]
    %v223 = vld [vmem:[#allocation7 + $0x40] sm:$0xff]
    %v224 = vld [vmem:[#allocation7 + $0x48] sm:$0xff]
    %v225 = vld [vmem:[#allocation7 + $0x50] sm:$0xff]
    %v226 = vld [vmem:[#allocation7 + $0x58] sm:$0xff]
    %v227 = vld [vmem:[#allocation7 + $0x60] sm:$0xff]
    %v228 = vld [vmem:[#allocation7 + $0x68] sm:$0xff]
    %v229 = vld [vmem:[#allocation7 + $0x70] sm:$0xff]
    %v230 = vld [vmem:[#allocation7 + $0x78] sm:$0xff]
    %v231 = vld [vmem:[#allocation7 + $0x80] sm:$0xff]
    %v232 = vld [vmem:[#allocation7 + $0x88] sm:$0xff]
    %v233 = vld [vmem:[#allocation7 + $0x90] sm:$0xff]
    %v234 = vld [vmem:[#allocation7 + $0x98] sm:$0xff]
    %v235 = vld [vmem:[#allocation7 + $0xa0] sm:$0xff]
    %v236 = vld [vmem:[#allocation7 + $0xa8] sm:$0xff]
    %v237 = vld [vmem:[#allocation7 + $0xb0] sm:$0xff]
    %v238 = vld [vmem:[#allocation7 + $0xb8] sm:$0xff]
    %v239 = vld [vmem:[#allocation7 + $0xc0] sm:$0xff]
    %v240 = vld [vmem:[#allocation7 + $0xc8] sm:$0xff]
    %v241 = vld [vmem:[#allocation7 + $0xd0] sm:$0xff]
    %v242 = vld [vmem:[#allocation7 + $0xd8] sm:$0xff]
    %v243 = vld [vmem:[#allocation7 + $0xe0] sm:$0xff]
    %v244 = vld [vmem:[#allocation7 + $0xe8] sm:$0xff]
    %v245 = vld [vmem:[#allocation7 + $0xf0] sm:$0xff]
    %v246 = vld [vmem:[#allocation7 + $0xf8] sm:$0xff]
    %v247 = vld [vmem:[#allocation7 + $0x100] sm:$0xff]
    %v248 = vld [vmem:[#allocation7 + $0x108] sm:$0xff]
    %v249 = vld [vmem:[#allocation7 + $0x110] sm:$0xff]
    %v250 = vld [vmem:[#allocation7 + $0x118] sm:$0xff]
    %v251 = vld [vmem:[#allocation7 + $0x120] sm:$0xff]
    %v252 = vld [vmem:[#allocation7 + $0x128] sm:$0xff]
    %v253 = vld [vmem:[#allocation7 + $0x130] sm:$0xff]
    %v254 = vld [vmem:[#allocation7 + $0x138] sm:$0xff]
    %v255 = vld [vmem:[#allocation7 + $0x140] sm:$0xff]
    %v256 = vld [vmem:[#allocation7 + $0x148] sm:$0xff]
    %v257 = vld [vmem:[#allocation7 + $0x150] sm:$0xff]
    %v258 = vld [vmem:[#allocation7 + $0x158] sm:$0xff]
    %v259 = vld [vmem:[#allocation7 + $0x160] sm:$0xff]
    %v260 = vld [vmem:[#allocation7 + $0x168] sm:$0xff]
    %v261 = vld [vmem:[#allocation7 + $0x170] sm:$0xff]
    %v262 = vld [vmem:[#allocation7 + $0x178] sm:$0xff]
    %v263 = vld [vmem:[#allocation7 + $0x180] sm:$0xff]
    %v264 = vld [vmem:[#allocation7 + $0x188] sm:$0xff]
    %v265 = vld [vmem:[#allocation7 + $0x190] sm:$0xff]
    %v266 = vld [vmem:[#allocation7 + $0x198] sm:$0xff]
    %v267 = vld [vmem:[#allocation7 + $0x1a0] sm:$0xff]
    %v268 = vld [vmem:[#allocation7 + $0x1a8] sm:$0xff]
    %v269 = vld [vmem:[#allocation7 + $0x1b0] sm:$0xff]
    %v270 = vld [vmem:[#allocation7 + $0x1b8] sm:$0xff]
    %v271 = vld [vmem:[#allocation7 + $0x1c0] sm:$0xff]
    %v272 = vld [vmem:[#allocation7 + $0x1c8] sm:$0xff]
    %v273 = vld [vmem:[#allocation7 + $0x1d0] sm:$0xff]
    %v274 = vld [vmem:[#allocation7 + $0x1d8] sm:$0xff]
    %v275 = vld [vmem:[#allocation7 + $0x1e0] sm:$0xff]
    %v276 = vld [vmem:[#allocation7 + $0x1e8] sm:$0xff]
    %v277 = vld [vmem:[#allocation7 + $0x1f0] sm:$0xff]
    %v278 = vld [vmem:[#allocation7 + $0x1f8] sm:$0xff]
    %v279 = vld [vmem:[#allocation8] sm:$0xff]
    %v281 = vperm.slane %v279, 0
    %v282 = vperm.slane %v279, 1
    %v283 = vperm.slane %v279, 2
    %v284 = vperm.slane %v279, 3
    %v285 = vperm.slane %v279, 4
    %v286 = vperm.slane %v279, 5
    %v287 = vperm.slane %v279, 6
    %v288 = vperm.slane %v279, 7
    %v299 = vunpack.c.l.b16 %v213
    %v300 = vunpack.c.l.b16 %v214
    %v301 = vpack.c.b16 %v300, %v299
    %v367 = vunpack.c.l.b16 %v215
    %v368 = vunpack.c.h.b16 %v215
    %v369 = vunpack.c.l.b16 %v216
    %v370 = vunpack.c.h.b16 %v216
    %v371 = vunpack.c.l.b16 %v217
    %v372 = vunpack.c.h.b16 %v217
    %v373 = vunpack.c.l.b16 %v218
    %v374 = vunpack.c.h.b16 %v218
    %v375 = vunpack.c.l.b16 %v219
    %v376 = vunpack.c.h.b16 %v219
    %v377 = vunpack.c.l.b16 %v220
    %v378 = vunpack.c.h.b16 %v220
    %v379 = vunpack.c.l.b16 %v221
    %v380 = vunpack.c.h.b16 %v221
    %v381 = vunpack.c.l.b16 %v222
    %v382 = vunpack.c.h.b16 %v222
    %v383 = vunpack.c.l.b16 %v223
    %v384 = vunpack.c.h.b16 %v223
    %v385 = vunpack.c.l.b16 %v224
    %v386 = vunpack.c.h.b16 %v224
    %v387 = vunpack.c.l.b16 %v225
    %v388 = vunpack.c.h.b16 %v225
    %v389 = vunpack.c.l.b16 %v226
    %v390 = vunpack.c.h.b16 %v226
    %v391 = vunpack.c.l.b16 %v227
    %v392 = vunpack.c.h.b16 %v227
    %v393 = vunpack.c.l.b16 %v228
    %v394 = vunpack.c.h.b16 %v228
    %v395 = vunpack.c.l.b16 %v229
    %v396 = vunpack.c.h.b16 %v229
    %v397 = vunpack.c.l.b16 %v230
    %v398 = vunpack.c.h.b16 %v230
    %v399 = vunpack.c.l.b16 %v231
    %v400 = vunpack.c.h.b16 %v231
    %v401 = vunpack.c.l.b16 %v232
    %v402 = vunpack.c.h.b16 %v232
    %v403 = vunpack.c.l.b16 %v233
    %v404 = vunpack.c.h.b16 %v233
    %v405 = vunpack.c.l.b16 %v234
    %v406 = vunpack.c.h.b16 %v234
    %v407 = vunpack.c.l.b16 %v235
    %v408 = vunpack.c.h.b16 %v235
    %v409 = vunpack.c.l.b16 %v236
    %v410 = vunpack.c.h.b16 %v236
    %v411 = vunpack.c.l.b16 %v237
    %v412 = vunpack.c.h.b16 %v237
    %v413 = vunpack.c.l.b16 %v238
    %v414 = vunpack.c.h.b16 %v238
    %v415 = vunpack.c.l.b16 %v239
    %v416 = vunpack.c.h.b16 %v239
    %v417 = vunpack.c.l.b16 %v240
    %v418 = vunpack.c.h.b16 %v240
    %v419 = vunpack.c.l.b16 %v241
    %v420 = vunpack.c.h.b16 %v241
    %v421 = vunpack.c.l.b16 %v242
    %v422 = vunpack.c.h.b16 %v242
    %v423 = vunpack.c.l.b16 %v243
    %v424 = vunpack.c.h.b16 %v243
    %v425 = vunpack.c.l.b16 %v244
    %v426 = vunpack.c.h.b16 %v244
    %v427 = vunpack.c.l.b16 %v245
    %v428 = vunpack.c.h.b16 %v245
    %v429 = vunpack.c.l.b16 %v246
    %v430 = vunpack.c.h.b16 %v246
    %v431 = vunpack.c.l.b16 %v247
    %v432 = vunpack.c.h.b16 %v247
    %v433 = vunpack.c.l.b16 %v248
    %v434 = vunpack.c.h.b16 %v248
    %v435 = vunpack.c.l.b16 %v249
    %v436 = vunpack.c.h.b16 %v249
    %v437 = vunpack.c.l.b16 %v250
    %v438 = vunpack.c.h.b16 %v250
    %v439 = vunpack.c.l.b16 %v251
    %v440 = vunpack.c.h.b16 %v251
    %v441 = vunpack.c.l.b16 %v252
    %v442 = vunpack.c.h.b16 %v252
    %v443 = vunpack.c.l.b16 %v253
    %v444 = vunpack.c.h.b16 %v253
    %v445 = vunpack.c.l.b16 %v254
    %v446 = vunpack.c.h.b16 %v254
    %v447 = vunpack.c.l.b16 %v255
    %v448 = vunpack.c.h.b16 %v255
    %v449 = vunpack.c.l.b16 %v256
    %v450 = vunpack.c.h.b16 %v256
    %v451 = vunpack.c.l.b16 %v257
    %v452 = vunpack.c.h.b16 %v257
    %v453 = vunpack.c.l.b16 %v258
    %v454 = vunpack.c.h.b16 %v258
    %v455 = vunpack.c.l.b16 %v259
    %v456 = vunpack.c.h.b16 %v259
    %v457 = vunpack.c.l.b16 %v260
    %v458 = vunpack.c.h.b16 %v260
    %v459 = vunpack.c.l.b16 %v261
    %v460 = vunpack.c.h.b16 %v261
    %v461 = vunpack.c.l.b16 %v262
    %v462 = vunpack.c.h.b16 %v262
    %v463 = vunpack.c.l.b16 %v263
    %v464 = vunpack.c.h.b16 %v263
    %v465 = vunpack.c.l.b16 %v264
    %v466 = vunpack.c.h.b16 %v264
    %v467 = vunpack.c.l.b16 %v265
    %v468 = vunpack.c.h.b16 %v265
    %v469 = vunpack.c.l.b16 %v266
    %v470 = vunpack.c.h.b16 %v266
    %v471 = vunpack.c.l.b16 %v267
    %v472 = vunpack.c.h.b16 %v267
    %v473 = vunpack.c.l.b16 %v268
    %v474 = vunpack.c.h.b16 %v268
    %v475 = vunpack.c.l.b16 %v269
    %v476 = vunpack.c.h.b16 %v269
    %v477 = vunpack.c.l.b16 %v270
    %v478 = vunpack.c.h.b16 %v270
    %v479 = vunpack.c.l.b16 %v271
    %v480 = vunpack.c.h.b16 %v271
    %v481 = vunpack.c.l.b16 %v272
    %v482 = vunpack.c.h.b16 %v272
    %v483 = vunpack.c.l.b16 %v273
    %v484 = vunpack.c.h.b16 %v273
    %v485 = vunpack.c.l.b16 %v274
    %v486 = vunpack.c.h.b16 %v274
    %v487 = vunpack.c.l.b16 %v275
    %v488 = vunpack.c.h.b16 %v275
    %v489 = vunpack.c.l.b16 %v276
    %v490 = vunpack.c.h.b16 %v276
    %v491 = vunpack.c.l.b16 %v277
    %v492 = vunpack.c.h.b16 %v277
    %v493 = vunpack.c.l.b16 %v278
    %v494 = vunpack.c.h.b16 %v278
    %v495 = vpack.c.b16 %v375, %v367
    %v496 = vpack.c.b16 %v376, %v368
    %v497 = vpack.c.b16 %v377, %v369
    %v498 = vpack.c.b16 %v378, %v370
    %v499 = vpack.c.b16 %v379, %v371
    %v500 = vpack.c.b16 %v380, %v372
    %v501 = vpack.c.b16 %v381, %v373
    %v502 = vpack.c.b16 %v382, %v374
    %v503 = vpack.c.b16 %v391, %v383
    %v504 = vpack.c.b16 %v392, %v384
    %v505 = vpack.c.b16 %v393, %v385
    %v506 = vpack.c.b16 %v394, %v386
    %v507 = vpack.c.b16 %v395, %v387
    %v508 = vpack.c.b16 %v396, %v388
    %v509 = vpack.c.b16 %v397, %v389
    %v510 = vpack.c.b16 %v398, %v390
    %v511 = vpack.c.b16 %v407, %v399
    %v512 = vpack.c.b16 %v408, %v400
    %v513 = vpack.c.b16 %v409, %v401
    %v514 = vpack.c.b16 %v410, %v402
    %v515 = vpack.c.b16 %v411, %v403
    %v516 = vpack.c.b16 %v412, %v404
    %v517 = vpack.c.b16 %v413, %v405
    %v518 = vpack.c.b16 %v414, %v406
    %v519 = vpack.c.b16 %v423, %v415
    %v520 = vpack.c.b16 %v424, %v416
    %v521 = vpack.c.b16 %v425, %v417
    %v522 = vpack.c.b16 %v426, %v418
    %v523 = vpack.c.b16 %v427, %v419
    %v524 = vpack.c.b16 %v428, %v420
    %v525 = vpack.c.b16 %v429, %v421
    %v526 = vpack.c.b16 %v430, %v422
    %v527 = vpack.c.b16 %v439, %v431
    %v528 = vpack.c.b16 %v440, %v432
    %v529 = vpack.c.b16 %v441, %v433
    %v530 = vpack.c.b16 %v442, %v434
    %v531 = vpack.c.b16 %v443, %v435
    %v532 = vpack.c.b16 %v444, %v436
    %v533 = vpack.c.b16 %v445, %v437
    %v534 = vpack.c.b16 %v446, %v438
    %v535 = vpack.c.b16 %v455, %v447
    %v536 = vpack.c.b16 %v456, %v448
    %v537 = vpack.c.b16 %v457, %v449
    %v538 = vpack.c.b16 %v458, %v450
    %v539 = vpack.c.b16 %v459, %v451
    %v540 = vpack.c.b16 %v460, %v452
    %v541 = vpack.c.b16 %v461, %v453
    %v542 = vpack.c.b16 %v462, %v454
    %v543 = vpack.c.b16 %v471, %v463
    %v544 = vpack.c.b16 %v472, %v464
    %v545 = vpack.c.b16 %v473, %v465
    %v546 = vpack.c.b16 %v474, %v466
    %v547 = vpack.c.b16 %v475, %v467
    %v548 = vpack.c.b16 %v476, %v468
    %v549 = vpack.c.b16 %v477, %v469
    %v550 = vpack.c.b16 %v478, %v470
    %v551 = vpack.c.b16 %v487, %v479
    %v552 = vpack.c.b16 %v488, %v480
    %v553 = vpack.c.b16 %v489, %v481
    %v554 = vpack.c.b16 %v490, %v482
    %v555 = vpack.c.b16 %v491, %v483
    %v556 = vpack.c.b16 %v492, %v484
    %v557 = vpack.c.b16 %v493, %v485
    %v558 = vpack.c.b16 %v494, %v486
    %623 = vmatpush.bf16.msra.mxu0 %v551
    %624 = vmatpush.bf16.msra.mxu0 %v543
    %625 = vmatpush.bf16.msra.mxu0 %v535
    %626 = vmatpush.bf16.msra.mxu0 %v527
    %627 = vmatpush.bf16.msra.mxu0 %v519
    %628 = vmatpush.bf16.msra.mxu0 %v511
    %629 = vmatpush.bf16.msra.mxu0 %v503
    %630 = vmatpush.bf16.msra.mxu0 %v495
    %631 = vmatmul.bf16.gmra.mxu0 %v301
    %v632 = vpop.f32.mrf.mxu0
    %v633 = vadd.f32 %v281, %v632
    %v634 = vpop.f32.mrf.mxu0
    %v635 = vadd.f32 %v281, %v634
    %636 = vdwg.mxu0
    %637 = vmatpush.bf16.msra.mxu0 %v552
    %638 = vmatpush.bf16.msra.mxu0 %v544
    %639 = vmatpush.bf16.msra.mxu0 %v536
    %640 = vmatpush.bf16.msra.mxu0 %v528
    %641 = vmatpush.bf16.msra.mxu0 %v520
    %642 = vmatpush.bf16.msra.mxu0 %v512
    %643 = vmatpush.bf16.msra.mxu0 %v504
    %644 = vmatpush.bf16.msra.mxu0 %v496
    %645 = vmatmul.bf16.gmra.mxu0 %v301
    %v646 = vpop.f32.mrf.mxu0
    %v647 = vadd.f32 %v282, %v646
    %v648 = vpop.f32.mrf.mxu0
    %v649 = vadd.f32 %v282, %v648
    %650 = vdwg.mxu0
    %651 = vmatpush.bf16.msra.mxu0 %v553
    %652 = vmatpush.bf16.msra.mxu0 %v545
    %653 = vmatpush.bf16.msra.mxu0 %v537
    %654 = vmatpush.bf16.msra.mxu0 %v529
    %655 = vmatpush.bf16.msra.mxu0 %v521
    %656 = vmatpush.bf16.msra.mxu0 %v513
    %657 = vmatpush.bf16.msra.mxu0 %v505
    %658 = vmatpush.bf16.msra.mxu0 %v497
    %659 = vmatmul.bf16.gmra.mxu0 %v301
    %v660 = vpop.f32.mrf.mxu0
    %v661 = vadd.f32 %v283, %v660
    %v662 = vpop.f32.mrf.mxu0
    %v663 = vadd.f32 %v283, %v662
    %664 = vdwg.mxu0
    %665 = vmatpush.bf16.msra.mxu0 %v554
    %666 = vmatpush.bf16.msra.mxu0 %v546
    %667 = vmatpush.bf16.msra.mxu0 %v538
    %668 = vmatpush.bf16.msra.mxu0 %v530
    %669 = vmatpush.bf16.msra.mxu0 %v522
    %670 = vmatpush.bf16.msra.mxu0 %v514
    %671 = vmatpush.bf16.msra.mxu0 %v506
    %672 = vmatpush.bf16.msra.mxu0 %v498
    %673 = vmatmul.bf16.gmra.mxu0 %v301
    %v674 = vpop.f32.mrf.mxu0
    %v675 = vadd.f32 %v284, %v674
    %v676 = vpop.f32.mrf.mxu0
    %v677 = vadd.f32 %v284, %v676
    %678 = vdwg.mxu0
    %679 = vmatpush.bf16.msra.mxu0 %v555
    %680 = vmatpush.bf16.msra.mxu0 %v547
    %681 = vmatpush.bf16.msra.mxu0 %v539
    %682 = vmatpush.bf16.msra.mxu0 %v531
    %683 = vmatpush.bf16.msra.mxu0 %v523
    %684 = vmatpush.bf16.msra.mxu0 %v515
    %685 = vmatpush.bf16.msra.mxu0 %v507
    %686 = vmatpush.bf16.msra.mxu0 %v499
    %687 = vmatmul.bf16.gmra.mxu0 %v301
    %v688 = vpop.f32.mrf.mxu0
    %v689 = vadd.f32 %v285, %v688
    %v690 = vpop.f32.mrf.mxu0
    %v691 = vadd.f32 %v285, %v690
    %692 = vdwg.mxu0
    %693 = vmatpush.bf16.msra.mxu0 %v556
    %694 = vmatpush.bf16.msra.mxu0 %v548
    %695 = vmatpush.bf16.msra.mxu0 %v540
    %696 = vmatpush.bf16.msra.mxu0 %v532
    %697 = vmatpush.bf16.msra.mxu0 %v524
    %698 = vmatpush.bf16.msra.mxu0 %v516
    %699 = vmatpush.bf16.msra.mxu0 %v508
    %700 = vmatpush.bf16.msra.mxu0 %v500
    %701 = vmatmul.bf16.gmra.mxu0 %v301
    %v702 = vpop.f32.mrf.mxu0
    %v703 = vadd.f32 %v286, %v702
    %v704 = vpop.f32.mrf.mxu0
    %v705 = vadd.f32 %v286, %v704
    %706 = vdwg.mxu0
    %707 = vmatpush.bf16.msra.mxu0 %v557
    %708 = vmatpush.bf16.msra.mxu0 %v549
    %709 = vmatpush.bf16.msra.mxu0 %v541
    %710 = vmatpush.bf16.msra.mxu0 %v533
    %711 = vmatpush.bf16.msra.mxu0 %v525
    %712 = vmatpush.bf16.msra.mxu0 %v517
    %713 = vmatpush.bf16.msra.mxu0 %v509
    %714 = vmatpush.bf16.msra.mxu0 %v501
    %715 = vmatmul.bf16.gmra.mxu0 %v301
    %v716 = vpop.f32.mrf.mxu0
    %v717 = vadd.f32 %v287, %v716
    %v718 = vpop.f32.mrf.mxu0
    %v719 = vadd.f32 %v287, %v718
    %720 = vdwg.mxu0
    %721 = vmatpush.bf16.msra.mxu0 %v558
    %722 = vmatpush.bf16.msra.mxu0 %v550
    %723 = vmatpush.bf16.msra.mxu0 %v542
    %724 = vmatpush.bf16.msra.mxu0 %v534
    %725 = vmatpush.bf16.msra.mxu0 %v526
    %726 = vmatpush.bf16.msra.mxu0 %v518
    %727 = vmatpush.bf16.msra.mxu0 %v510
    %728 = vmatpush.bf16.msra.mxu0 %v502
    %729 = vmatmul.bf16.gmra.mxu0 %v301
    %v730 = vpop.f32.mrf.mxu0
    %v731 = vadd.f32 %v288, %v730
    %v732 = vpop.f32.mrf.mxu0
    %v733 = vadd.f32 %v288, %v732
    %734 = vdwg.mxu0
    %v735 = vmul.f32 %v633, 0.01
    %v736 = vmul.f32 %v647, 0.01
    %v737 = vmul.f32 %v661, 0.01
    %v738 = vmul.f32 %v675, 0.01
    %v739 = vmul.f32 %v689, 0.01
    %v740 = vmul.f32 %v703, 0.01
    %v741 = vmul.f32 %v717, 0.01
    %v742 = vmul.f32 %v731, 0.01
    %v743 = vmul.f32 %v635, 0.01
    %v744 = vmul.f32 %v649, 0.01
    %v745 = vmul.f32 %v663, 0.01
    %v746 = vmul.f32 %v677, 0.01
    %v747 = vmul.f32 %v691, 0.01
    %v748 = vmul.f32 %v705, 0.01
    %v749 = vmul.f32 %v719, 0.01
    %v750 = vmul.f32 %v733, 0.01
    %v751 = vmax.f32 %v633, %v735
    %v752 = vmax.f32 %v647, %v736
    %v753 = vmax.f32 %v661, %v737
    %v754 = vmax.f32 %v675, %v738
    %v755 = vmax.f32 %v689, %v739
    %v756 = vmax.f32 %v703, %v740
    %v757 = vmax.f32 %v717, %v741
    %v758 = vmax.f32 %v731, %v742
    %v759 = vmax.f32 %v635, %v743
    %v760 = vmax.f32 %v649, %v744
    %v761 = vmax.f32 %v663, %v745
    %v762 = vmax.f32 %v677, %v746
    %v763 = vmax.f32 %v691, %v747
    %v764 = vmax.f32 %v705, %v748
    %v765 = vmax.f32 %v719, %v749
    %v766 = vmax.f32 %v733, %v750
    %v767 = vpack.c.bf16 %v759, %v751
    %v768 = vpack.c.bf16 %v760, %v752
    %v769 = vpack.c.bf16 %v761, %v753
    %v770 = vpack.c.bf16 %v762, %v754
    %v771 = vpack.c.bf16 %v763, %v755
    %v772 = vpack.c.bf16 %v764, %v756
    %v773 = vpack.c.bf16 %v765, %v757
    %v774 = vpack.c.bf16 %v766, %v758
    %v775 = vld [vmem:[#allocation10] sm:$0xf]
    %v776 = vld [vmem:[#allocation10 + $0x4] sm:$0xf]
    %v777 = vld [vmem:[#allocation10 + $0x8] sm:$0xf]
    %v778 = vld [vmem:[#allocation10 + $0xc] sm:$0xf]
    %v779 = vld [vmem:[#allocation10 + $0x10] sm:$0xf]
    %v780 = vld [vmem:[#allocation10 + $0x14] sm:$0xf]
    %v781 = vld [vmem:[#allocation10 + $0x18] sm:$0xf]
    %v782 = vld [vmem:[#allocation10 + $0x1c] sm:$0xf]
    %v783 = vld [vmem:[#allocation10 + $0x20] sm:$0xf]
    %v784 = vld [vmem:[#allocation10 + $0x24] sm:$0xf]
    %v785 = vld [vmem:[#allocation10 + $0x28] sm:$0xf]
    %v786 = vld [vmem:[#allocation10 + $0x2c] sm:$0xf]
    %v787 = vld [vmem:[#allocation10 + $0x30] sm:$0xf]
    %v788 = vld [vmem:[#allocation10 + $0x34] sm:$0xf]
    %v789 = vld [vmem:[#allocation10 + $0x38] sm:$0xf]
    %v790 = vld [vmem:[#allocation10 + $0x3c] sm:$0xf]
    %v791 = vld [vmem:[#allocation10 + $0x40] sm:$0xf]
    %v792 = vld [vmem:[#allocation10 + $0x44] sm:$0xf]
    %v793 = vld [vmem:[#allocation10 + $0x48] sm:$0xf]
    %v794 = vld [vmem:[#allocation10 + $0x4c] sm:$0xf]
    %v795 = vld [vmem:[#allocation10 + $0x50] sm:$0xf]
    %v796 = vld [vmem:[#allocation10 + $0x54] sm:$0xf]
    %v797 = vld [vmem:[#allocation10 + $0x58] sm:$0xf]
    %v798 = vld [vmem:[#allocation10 + $0x5c] sm:$0xf]
    %v799 = vld [vmem:[#allocation10 + $0x60] sm:$0xf]
    %v800 = vld [vmem:[#allocation10 + $0x64] sm:$0xf]
    %v801 = vld [vmem:[#allocation10 + $0x68] sm:$0xf]
    %v802 = vld [vmem:[#allocation10 + $0x6c] sm:$0xf]
    %v803 = vld [vmem:[#allocation10 + $0x70] sm:$0xf]
    %v804 = vld [vmem:[#allocation10 + $0x74] sm:$0xf]
    %v805 = vld [vmem:[#allocation10 + $0x78] sm:$0xf]
    %v806 = vld [vmem:[#allocation10 + $0x7c] sm:$0xf]
    %v807 = vld [vmem:[#allocation10 + $0x80] sm:$0xf]
    %v808 = vld [vmem:[#allocation10 + $0x84] sm:$0xf]
    %v809 = vld [vmem:[#allocation10 + $0x88] sm:$0xf]
    %v810 = vld [vmem:[#allocation10 + $0x8c] sm:$0xf]
    %v811 = vld [vmem:[#allocation10 + $0x90] sm:$0xf]
    %v812 = vld [vmem:[#allocation10 + $0x94] sm:$0xf]
    %v813 = vld [vmem:[#allocation10 + $0x98] sm:$0xf]
    %v814 = vld [vmem:[#allocation10 + $0x9c] sm:$0xf]
    %v815 = vld [vmem:[#allocation10 + $0xa0] sm:$0xf]
    %v816 = vld [vmem:[#allocation10 + $0xa4] sm:$0xf]
    %v817 = vld [vmem:[#allocation10 + $0xa8] sm:$0xf]
    %v818 = vld [vmem:[#allocation10 + $0xac] sm:$0xf]
    %v819 = vld [vmem:[#allocation10 + $0xb0] sm:$0xf]
    %v820 = vld [vmem:[#allocation10 + $0xb4] sm:$0xf]
    %v821 = vld [vmem:[#allocation10 + $0xb8] sm:$0xf]
    %v822 = vld [vmem:[#allocation10 + $0xbc] sm:$0xf]
    %v823 = vld [vmem:[#allocation10 + $0xc0] sm:$0xf]
    %v824 = vld [vmem:[#allocation10 + $0xc4] sm:$0xf]
    %v825 = vld [vmem:[#allocation10 + $0xc8] sm:$0xf]
    %v826 = vld [vmem:[#allocation10 + $0xcc] sm:$0xf]
    %v827 = vld [vmem:[#allocation10 + $0xd0] sm:$0xf]
    %v828 = vld [vmem:[#allocation10 + $0xd4] sm:$0xf]
    %v829 = vld [vmem:[#allocation10 + $0xd8] sm:$0xf]
    %v830 = vld [vmem:[#allocation10 + $0xdc] sm:$0xf]
    %v831 = vld [vmem:[#allocation10 + $0xe0] sm:$0xf]
    %v832 = vld [vmem:[#allocation10 + $0xe4] sm:$0xf]
    %v833 = vld [vmem:[#allocation10 + $0xe8] sm:$0xf]
    %v834 = vld [vmem:[#allocation10 + $0xec] sm:$0xf]
    %v835 = vld [vmem:[#allocation10 + $0xf0] sm:$0xf]
    %v836 = vld [vmem:[#allocation10 + $0xf4] sm:$0xf]
    %v837 = vld [vmem:[#allocation10 + $0xf8] sm:$0xf]
    %v838 = vld [vmem:[#allocation10 + $0xfc] sm:$0xf]
    %v839 = vld [vmem:[#allocation10 + $0x100] sm:$0xf]
    %v840 = vld [vmem:[#allocation10 + $0x104] sm:$0xf]
    %v841 = vld [vmem:[#allocation10 + $0x108] sm:$0xf]
    %v842 = vld [vmem:[#allocation10 + $0x10c] sm:$0xf]
    %v843 = vld [vmem:[#allocation10 + $0x110] sm:$0xf]
    %v844 = vld [vmem:[#allocation10 + $0x114] sm:$0xf]
    %v845 = vld [vmem:[#allocation10 + $0x118] sm:$0xf]
    %v846 = vld [vmem:[#allocation10 + $0x11c] sm:$0xf]
    %v847 = vld [vmem:[#allocation10 + $0x120] sm:$0xf]
    %v848 = vld [vmem:[#allocation10 + $0x124] sm:$0xf]
    %v849 = vld [vmem:[#allocation10 + $0x128] sm:$0xf]
    %v850 = vld [vmem:[#allocation10 + $0x12c] sm:$0xf]
    %v851 = vld [vmem:[#allocation10 + $0x130] sm:$0xf]
    %v852 = vld [vmem:[#allocation10 + $0x134] sm:$0xf]
    %v853 = vld [vmem:[#allocation10 + $0x138] sm:$0xf]
    %v854 = vld [vmem:[#allocation10 + $0x13c] sm:$0xf]
    %v855 = vld [vmem:[#allocation10 + $0x140] sm:$0xf]
    %v856 = vld [vmem:[#allocation10 + $0x144] sm:$0xf]
    %v857 = vld [vmem:[#allocation10 + $0x148] sm:$0xf]
    %v858 = vld [vmem:[#allocation10 + $0x14c] sm:$0xf]
    %v859 = vld [vmem:[#allocation10 + $0x150] sm:$0xf]
    %v860 = vld [vmem:[#allocation10 + $0x154] sm:$0xf]
    %v861 = vld [vmem:[#allocation10 + $0x158] sm:$0xf]
    %v862 = vld [vmem:[#allocation10 + $0x15c] sm:$0xf]
    %v863 = vld [vmem:[#allocation10 + $0x160] sm:$0xf]
    %v864 = vld [vmem:[#allocation10 + $0x164] sm:$0xf]
    %v865 = vld [vmem:[#allocation10 + $0x168] sm:$0xf]
    %v866 = vld [vmem:[#allocation10 + $0x16c] sm:$0xf]
    %v867 = vld [vmem:[#allocation10 + $0x170] sm:$0xf]
    %v868 = vld [vmem:[#allocation10 + $0x174] sm:$0xf]
    %v869 = vld [vmem:[#allocation10 + $0x178] sm:$0xf]
    %v870 = vld [vmem:[#allocation10 + $0x17c] sm:$0xf]
    %v871 = vld [vmem:[#allocation10 + $0x180] sm:$0xf]
    %v872 = vld [vmem:[#allocation10 + $0x184] sm:$0xf]
    %v873 = vld [vmem:[#allocation10 + $0x188] sm:$0xf]
    %v874 = vld [vmem:[#allocation10 + $0x18c] sm:$0xf]
    %v875 = vld [vmem:[#allocation10 + $0x190] sm:$0xf]
    %v876 = vld [vmem:[#allocation10 + $0x194] sm:$0xf]
    %v877 = vld [vmem:[#allocation10 + $0x198] sm:$0xf]
    %v878 = vld [vmem:[#allocation10 + $0x19c] sm:$0xf]
    %v879 = vld [vmem:[#allocation10 + $0x1a0] sm:$0xf]
    %v880 = vld [vmem:[#allocation10 + $0x1a4] sm:$0xf]
    %v881 = vld [vmem:[#allocation10 + $0x1a8] sm:$0xf]
    %v882 = vld [vmem:[#allocation10 + $0x1ac] sm:$0xf]
    %v883 = vld [vmem:[#allocation10 + $0x1b0] sm:$0xf]
    %v884 = vld [vmem:[#allocation10 + $0x1b4] sm:$0xf]
    %v885 = vld [vmem:[#allocation10 + $0x1b8] sm:$0xf]
    %v886 = vld [vmem:[#allocation10 + $0x1bc] sm:$0xf]
    %v887 = vld [vmem:[#allocation10 + $0x1c0] sm:$0xf]
    %v888 = vld [vmem:[#allocation10 + $0x1c4] sm:$0xf]
    %v889 = vld [vmem:[#allocation10 + $0x1c8] sm:$0xf]
    %v890 = vld [vmem:[#allocation10 + $0x1cc] sm:$0xf]
    %v891 = vld [vmem:[#allocation10 + $0x1d0] sm:$0xf]
    %v892 = vld [vmem:[#allocation10 + $0x1d4] sm:$0xf]
    %v893 = vld [vmem:[#allocation10 + $0x1d8] sm:$0xf]
    %v894 = vld [vmem:[#allocation10 + $0x1dc] sm:$0xf]
    %v895 = vld [vmem:[#allocation10 + $0x1e0] sm:$0xf]
    %v896 = vld [vmem:[#allocation10 + $0x1e4] sm:$0xf]
    %v897 = vld [vmem:[#allocation10 + $0x1e8] sm:$0xf]
    %v898 = vld [vmem:[#allocation10 + $0x1ec] sm:$0xf]
    %v899 = vld [vmem:[#allocation10 + $0x1f0] sm:$0xf]
    %v900 = vld [vmem:[#allocation10 + $0x1f4] sm:$0xf]
    %v901 = vld [vmem:[#allocation10 + $0x1f8] sm:$0xf]
    %v902 = vld [vmem:[#allocation10 + $0x1fc] sm:$0xf]
    %v903 = vld [vmem:[#allocation11] sm:$0x1]
    %v905 = vperm.slane %v903, 0
    %v1035 = vunpack.c.l.b16 %v775
    %v1036 = vunpack.c.l.b16 %v776
    %v1037 = vunpack.c.l.b16 %v777
    %v1038 = vunpack.c.l.b16 %v778
    %v1039 = vunpack.c.l.b16 %v779
    %v1040 = vunpack.c.l.b16 %v780
    %v1041 = vunpack.c.l.b16 %v781
    %v1042 = vunpack.c.l.b16 %v782
    %v1043 = vunpack.c.l.b16 %v783
    %v1044 = vunpack.c.l.b16 %v784
    %v1045 = vunpack.c.l.b16 %v785
    %v1046 = vunpack.c.l.b16 %v786
    %v1047 = vunpack.c.l.b16 %v787
    %v1048 = vunpack.c.l.b16 %v788
    %v1049 = vunpack.c.l.b16 %v789
    %v1050 = vunpack.c.l.b16 %v790
    %v1051 = vunpack.c.l.b16 %v791
    %v1052 = vunpack.c.l.b16 %v792
    %v1053 = vunpack.c.l.b16 %v793
    %v1054 = vunpack.c.l.b16 %v794
    %v1055 = vunpack.c.l.b16 %v795
    %v1056 = vunpack.c.l.b16 %v796
    %v1057 = vunpack.c.l.b16 %v797
    %v1058 = vunpack.c.l.b16 %v798
    %v1059 = vunpack.c.l.b16 %v799
    %v1060 = vunpack.c.l.b16 %v800
    %v1061 = vunpack.c.l.b16 %v801
    %v1062 = vunpack.c.l.b16 %v802
    %v1063 = vunpack.c.l.b16 %v803
    %v1064 = vunpack.c.l.b16 %v804
    %v1065 = vunpack.c.l.b16 %v805
    %v1066 = vunpack.c.l.b16 %v806
    %v1067 = vunpack.c.l.b16 %v807
    %v1068 = vunpack.c.l.b16 %v808
    %v1069 = vunpack.c.l.b16 %v809
    %v1070 = vunpack.c.l.b16 %v810
    %v1071 = vunpack.c.l.b16 %v811
    %v1072 = vunpack.c.l.b16 %v812
    %v1073 = vunpack.c.l.b16 %v813
    %v1074 = vunpack.c.l.b16 %v814
    %v1075 = vunpack.c.l.b16 %v815
    %v1076 = vunpack.c.l.b16 %v816
    %v1077 = vunpack.c.l.b16 %v817
    %v1078 = vunpack.c.l.b16 %v818
    %v1079 = vunpack.c.l.b16 %v819
    %v1080 = vunpack.c.l.b16 %v820
    %v1081 = vunpack.c.l.b16 %v821
    %v1082 = vunpack.c.l.b16 %v822
    %v1083 = vunpack.c.l.b16 %v823
    %v1084 = vunpack.c.l.b16 %v824
    %v1085 = vunpack.c.l.b16 %v825
    %v1086 = vunpack.c.l.b16 %v826
    %v1087 = vunpack.c.l.b16 %v827
    %v1088 = vunpack.c.l.b16 %v828
    %v1089 = vunpack.c.l.b16 %v829
    %v1090 = vunpack.c.l.b16 %v830
    %v1091 = vunpack.c.l.b16 %v831
    %v1092 = vunpack.c.l.b16 %v832
    %v1093 = vunpack.c.l.b16 %v833
    %v1094 = vunpack.c.l.b16 %v834
    %v1095 = vunpack.c.l.b16 %v835
    %v1096 = vunpack.c.l.b16 %v836
    %v1097 = vunpack.c.l.b16 %v837
    %v1098 = vunpack.c.l.b16 %v838
    %v1099 = vunpack.c.l.b16 %v839
    %v1100 = vunpack.c.l.b16 %v840
    %v1101 = vunpack.c.l.b16 %v841
    %v1102 = vunpack.c.l.b16 %v842
    %v1103 = vunpack.c.l.b16 %v843
    %v1104 = vunpack.c.l.b16 %v844
    %v1105 = vunpack.c.l.b16 %v845
    %v1106 = vunpack.c.l.b16 %v846
    %v1107 = vunpack.c.l.b16 %v847
    %v1108 = vunpack.c.l.b16 %v848
    %v1109 = vunpack.c.l.b16 %v849
    %v1110 = vunpack.c.l.b16 %v850
    %v1111 = vunpack.c.l.b16 %v851
    %v1112 = vunpack.c.l.b16 %v852
    %v1113 = vunpack.c.l.b16 %v853
    %v1114 = vunpack.c.l.b16 %v854
    %v1115 = vunpack.c.l.b16 %v855
    %v1116 = vunpack.c.l.b16 %v856
    %v1117 = vunpack.c.l.b16 %v857
    %v1118 = vunpack.c.l.b16 %v858
    %v1119 = vunpack.c.l.b16 %v859
    %v1120 = vunpack.c.l.b16 %v860
    %v1121 = vunpack.c.l.b16 %v861
    %v1122 = vunpack.c.l.b16 %v862
    %v1123 = vunpack.c.l.b16 %v863
    %v1124 = vunpack.c.l.b16 %v864
    %v1125 = vunpack.c.l.b16 %v865
    %v1126 = vunpack.c.l.b16 %v866
    %v1127 = vunpack.c.l.b16 %v867
    %v1128 = vunpack.c.l.b16 %v868
    %v1129 = vunpack.c.l.b16 %v869
    %v1130 = vunpack.c.l.b16 %v870
    %v1131 = vunpack.c.l.b16 %v871
    %v1132 = vunpack.c.l.b16 %v872
    %v1133 = vunpack.c.l.b16 %v873
    %v1134 = vunpack.c.l.b16 %v874
    %v1135 = vunpack.c.l.b16 %v875
    %v1136 = vunpack.c.l.b16 %v876
    %v1137 = vunpack.c.l.b16 %v877
    %v1138 = vunpack.c.l.b16 %v878
    %v1139 = vunpack.c.l.b16 %v879
    %v1140 = vunpack.c.l.b16 %v880
    %v1141 = vunpack.c.l.b16 %v881
    %v1142 = vunpack.c.l.b16 %v882
    %v1143 = vunpack.c.l.b16 %v883
    %v1144 = vunpack.c.l.b16 %v884
    %v1145 = vunpack.c.l.b16 %v885
    %v1146 = vunpack.c.l.b16 %v886
    %v1147 = vunpack.c.l.b16 %v887
    %v1148 = vunpack.c.l.b16 %v888
    %v1149 = vunpack.c.l.b16 %v889
    %v1150 = vunpack.c.l.b16 %v890
    %v1151 = vunpack.c.l.b16 %v891
    %v1152 = vunpack.c.l.b16 %v892
    %v1153 = vunpack.c.l.b16 %v893
    %v1154 = vunpack.c.l.b16 %v894
    %v1155 = vunpack.c.l.b16 %v895
    %v1156 = vunpack.c.l.b16 %v896
    %v1157 = vunpack.c.l.b16 %v897
    %v1158 = vunpack.c.l.b16 %v898
    %v1159 = vunpack.c.l.b16 %v899
    %v1160 = vunpack.c.l.b16 %v900
    %v1161 = vunpack.c.l.b16 %v901
    %v1162 = vunpack.c.l.b16 %v902
    %v1163 = vpack.c.b16 %v1036, %v1035
    %v1164 = vpack.c.b16 %v1038, %v1037
    %v1165 = vpack.c.b16 %v1040, %v1039
    %v1166 = vpack.c.b16 %v1042, %v1041
    %v1167 = vpack.c.b16 %v1044, %v1043
    %v1168 = vpack.c.b16 %v1046, %v1045
    %v1169 = vpack.c.b16 %v1048, %v1047
    %v1170 = vpack.c.b16 %v1050, %v1049
    %v1171 = vpack.c.b16 %v1052, %v1051
    %v1172 = vpack.c.b16 %v1054, %v1053
    %v1173 = vpack.c.b16 %v1056, %v1055
    %v1174 = vpack.c.b16 %v1058, %v1057
    %v1175 = vpack.c.b16 %v1060, %v1059
    %v1176 = vpack.c.b16 %v1062, %v1061
    %v1177 = vpack.c.b16 %v1064, %v1063
    %v1178 = vpack.c.b16 %v1066, %v1065
    %v1179 = vpack.c.b16 %v1068, %v1067
    %v1180 = vpack.c.b16 %v1070, %v1069
    %v1181 = vpack.c.b16 %v1072, %v1071
    %v1182 = vpack.c.b16 %v1074, %v1073
    %v1183 = vpack.c.b16 %v1076, %v1075
    %v1184 = vpack.c.b16 %v1078, %v1077
    %v1185 = vpack.c.b16 %v1080, %v1079
    %v1186 = vpack.c.b16 %v1082, %v1081
    %v1187 = vpack.c.b16 %v1084, %v1083
    %v1188 = vpack.c.b16 %v1086, %v1085
    %v1189 = vpack.c.b16 %v1088, %v1087
    %v1190 = vpack.c.b16 %v1090, %v1089
    %v1191 = vpack.c.b16 %v1092, %v1091
    %v1192 = vpack.c.b16 %v1094, %v1093
    %v1193 = vpack.c.b16 %v1096, %v1095
    %v1194 = vpack.c.b16 %v1098, %v1097
    %v1195 = vpack.c.b16 %v1100, %v1099
    %v1196 = vpack.c.b16 %v1102, %v1101
    %v1197 = vpack.c.b16 %v1104, %v1103
    %v1198 = vpack.c.b16 %v1106, %v1105
    %v1199 = vpack.c.b16 %v1108, %v1107
    %v1200 = vpack.c.b16 %v1110, %v1109
    %v1201 = vpack.c.b16 %v1112, %v1111
    %v1202 = vpack.c.b16 %v1114, %v1113
    %v1203 = vpack.c.b16 %v1116, %v1115
    %v1204 = vpack.c.b16 %v1118, %v1117
    %v1205 = vpack.c.b16 %v1120, %v1119
    %v1206 = vpack.c.b16 %v1122, %v1121
    %v1207 = vpack.c.b16 %v1124, %v1123
    %v1208 = vpack.c.b16 %v1126, %v1125
    %v1209 = vpack.c.b16 %v1128, %v1127
    %v1210 = vpack.c.b16 %v1130, %v1129
    %v1211 = vpack.c.b16 %v1132, %v1131
    %v1212 = vpack.c.b16 %v1134, %v1133
    %v1213 = vpack.c.b16 %v1136, %v1135
    %v1214 = vpack.c.b16 %v1138, %v1137
    %v1215 = vpack.c.b16 %v1140, %v1139
    %v1216 = vpack.c.b16 %v1142, %v1141
    %v1217 = vpack.c.b16 %v1144, %v1143
    %v1218 = vpack.c.b16 %v1146, %v1145
    %v1219 = vpack.c.b16 %v1148, %v1147
    %v1220 = vpack.c.b16 %v1150, %v1149
    %v1221 = vpack.c.b16 %v1152, %v1151
    %v1222 = vpack.c.b16 %v1154, %v1153
    %v1223 = vpack.c.b16 %v1156, %v1155
    %v1224 = vpack.c.b16 %v1158, %v1157
    %v1225 = vpack.c.b16 %v1160, %v1159
    %v1226 = vpack.c.b16 %v1162, %v1161
    %1291 = vmatpush.bf16.msra.mxu0 %v1170
    %1292 = vmatpush.bf16.msra.mxu0 %v1169
    %1293 = vmatpush.bf16.msra.mxu0 %v1168
    %1294 = vmatpush.bf16.msra.mxu0 %v1167
    %1295 = vmatpush.bf16.msra.mxu0 %v1166
    %1296 = vmatpush.bf16.msra.mxu0 %v1165
    %1297 = vmatpush.bf16.msra.mxu0 %v1164
    %1298 = vmatpush.bf16.msra.mxu0 %v1163
    %1299 = vmatmul.bf16.gmra.mxu0 %v767
    %v1300 = vpop.f32.mrf.mxu0
    %v1301 = vadd.f32 %v905, %v1300
    %v1302 = vpop.f32.mrf.mxu0
    %v1303 = vadd.f32 %v905, %v1302
    %1304 = vdwg.mxu0
    %1305 = vmatpush.bf16.msra.mxu0 %v1178
    %1306 = vmatpush.bf16.msra.mxu0 %v1177
    %1307 = vmatpush.bf16.msra.mxu0 %v1176
    %1308 = vmatpush.bf16.msra.mxu0 %v1175
    %1309 = vmatpush.bf16.msra.mxu0 %v1174
    %1310 = vmatpush.bf16.msra.mxu0 %v1173
    %1311 = vmatpush.bf16.msra.mxu0 %v1172
    %1312 = vmatpush.bf16.msra.mxu0 %v1171
    %1313 = vmatmul.bf16.gmra.mxu0 %v768
    %v1314 = vpop.f32.mrf.mxu0
    %v1315 = vadd.f32 %v1301, %v1314
    %v1316 = vpop.f32.mrf.mxu0
    %v1317 = vadd.f32 %v1303, %v1316
    %1318 = vdwg.mxu0
    %1319 = vmatpush.bf16.msra.mxu0 %v1186
    %1320 = vmatpush.bf16.msra.mxu0 %v1185
    %1321 = vmatpush.bf16.msra.mxu0 %v1184
    %1322 = vmatpush.bf16.msra.mxu0 %v1183
    %1323 = vmatpush.bf16.msra.mxu0 %v1182
    %1324 = vmatpush.bf16.msra.mxu0 %v1181
    %1325 = vmatpush.bf16.msra.mxu0 %v1180
    %1326 = vmatpush.bf16.msra.mxu0 %v1179
    %1327 = vmatmul.bf16.gmra.mxu0 %v769
    %v1328 = vpop.f32.mrf.mxu0
    %v1329 = vadd.f32 %v1315, %v1328
    %v1330 = vpop.f32.mrf.mxu0
    %v1331 = vadd.f32 %v1317, %v1330
    %1332 = vdwg.mxu0
    %1333 = vmatpush.bf16.msra.mxu0 %v1194
    %1334 = vmatpush.bf16.msra.mxu0 %v1193
    %1335 = vmatpush.bf16.msra.mxu0 %v1192
    %1336 = vmatpush.bf16.msra.mxu0 %v1191
    %1337 = vmatpush.bf16.msra.mxu0 %v1190
    %1338 = vmatpush.bf16.msra.mxu0 %v1189
    %1339 = vmatpush.bf16.msra.mxu0 %v1188
    %1340 = vmatpush.bf16.msra.mxu0 %v1187
    %1341 = vmatmul.bf16.gmra.mxu0 %v770
    %v1342 = vpop.f32.mrf.mxu0
    %v1343 = vadd.f32 %v1329, %v1342
    %v1344 = vpop.f32.mrf.mxu0
    %v1345 = vadd.f32 %v1331, %v1344
    %1346 = vdwg.mxu0
    %1347 = vmatpush.bf16.msra.mxu0 %v1202
    %1348 = vmatpush.bf16.msra.mxu0 %v1201
    %1349 = vmatpush.bf16.msra.mxu0 %v1200
    %1350 = vmatpush.bf16.msra.mxu0 %v1199
    %1351 = vmatpush.bf16.msra.mxu0 %v1198
    %1352 = vmatpush.bf16.msra.mxu0 %v1197
    %1353 = vmatpush.bf16.msra.mxu0 %v1196
    %1354 = vmatpush.bf16.msra.mxu0 %v1195
    %1355 = vmatmul.bf16.gmra.mxu0 %v771
    %v1356 = vpop.f32.mrf.mxu0
    %v1357 = vadd.f32 %v1343, %v1356
    %v1358 = vpop.f32.mrf.mxu0
    %v1359 = vadd.f32 %v1345, %v1358
    %1360 = vdwg.mxu0
    %1361 = vmatpush.bf16.msra.mxu0 %v1210
    %1362 = vmatpush.bf16.msra.mxu0 %v1209
    %1363 = vmatpush.bf16.msra.mxu0 %v1208
    %1364 = vmatpush.bf16.msra.mxu0 %v1207
    %1365 = vmatpush.bf16.msra.mxu0 %v1206
    %1366 = vmatpush.bf16.msra.mxu0 %v1205
    %1367 = vmatpush.bf16.msra.mxu0 %v1204
    %1368 = vmatpush.bf16.msra.mxu0 %v1203
    %1369 = vmatmul.bf16.gmra.mxu0 %v772
    %v1370 = vpop.f32.mrf.mxu0
    %v1371 = vadd.f32 %v1357, %v1370
    %v1372 = vpop.f32.mrf.mxu0
    %v1373 = vadd.f32 %v1359, %v1372
    %1374 = vdwg.mxu0
    %1375 = vmatpush.bf16.msra.mxu0 %v1218
    %1376 = vmatpush.bf16.msra.mxu0 %v1217
    %1377 = vmatpush.bf16.msra.mxu0 %v1216
    %1378 = vmatpush.bf16.msra.mxu0 %v1215
    %1379 = vmatpush.bf16.msra.mxu0 %v1214
    %1380 = vmatpush.bf16.msra.mxu0 %v1213
    %1381 = vmatpush.bf16.msra.mxu0 %v1212
    %1382 = vmatpush.bf16.msra.mxu0 %v1211
    %1383 = vmatmul.bf16.gmra.mxu0 %v773
    %v1384 = vpop.f32.mrf.mxu0
    %v1385 = vadd.f32 %v1371, %v1384
    %v1386 = vpop.f32.mrf.mxu0
    %v1387 = vadd.f32 %v1373, %v1386
    %1388 = vdwg.mxu0
    %1389 = vmatpush.bf16.msra.mxu0 %v1226
    %1390 = vmatpush.bf16.msra.mxu0 %v1225
    %1391 = vmatpush.bf16.msra.mxu0 %v1224
    %1392 = vmatpush.bf16.msra.mxu0 %v1223
    %1393 = vmatpush.bf16.msra.mxu0 %v1222
    %1394 = vmatpush.bf16.msra.mxu0 %v1221
    %1395 = vmatpush.bf16.msra.mxu0 %v1220
    %1396 = vmatpush.bf16.msra.mxu0 %v1219
    %1397 = vmatmul.bf16.gmra.mxu0 %v774
    %v1398 = vpop.f32.mrf.mxu0
    %v1399 = vadd.f32 %v1385, %v1398
    %v1400 = vpop.f32.mrf.mxu0
    %v1401 = vadd.f32 %v1387, %v1400
    %1402 = vdwg.mxu0
    %v1403 = vmul.f32 %v1399, 0.01
    %v1404 = vmul.f32 %v1401, 0.01
    %v1405 = vmax.f32 %v1399, %v1403
    %v1406 = vmax.f32 %v1401, %v1404
    %v1407 = vpack.c.bf16 %v1406, %v1405
    %v1408 = vld [vmem:[#allocation13] sm:$0xff]
    %v1409 = vld [vmem:[#allocation13 + $0x8] sm:$0xff]
    %v1410 = vld [vmem:[#allocation13 + $0x10] sm:$0xff]
    %v1411 = vld [vmem:[#allocation13 + $0x18] sm:$0xff]
    %v1412 = vld [vmem:[#allocation13 + $0x20] sm:$0xff]
    %v1413 = vld [vmem:[#allocation13 + $0x28] sm:$0xff]
    %v1414 = vld [vmem:[#allocation13 + $0x30] sm:$0xff]
    %v1415 = vld [vmem:[#allocation13 + $0x38] sm:$0xff]
    %v1416 = vld [vmem:[#allocation13 + $0x40] sm:$0xff]
    %v1417 = vld [vmem:[#allocation13 + $0x48] sm:$0xff]
    %v1418 = vld [vmem:[#allocation13 + $0x50] sm:$0xff]
    %v1419 = vld [vmem:[#allocation13 + $0x58] sm:$0xff]
    %v1420 = vld [vmem:[#allocation13 + $0x60] sm:$0xff]
    %v1421 = vld [vmem:[#allocation13 + $0x68] sm:$0xff]
    %v1422 = vld [vmem:[#allocation13 + $0x70] sm:$0xff]
    %v1423 = vld [vmem:[#allocation13 + $0x78] sm:$0xff]
    %v1424 = vld [vmem:[%s7] sm:$0x3]
    %v1426 = vperm.slane %v1424, 0
    %v1427 = vperm.slane %v1424, 1
    %v1446 = vunpack.c.l.b16 %v1408
    %v1447 = vunpack.c.h.b16 %v1408
    %v1448 = vunpack.c.l.b16 %v1409
    %v1449 = vunpack.c.h.b16 %v1409
    %v1450 = vunpack.c.l.b16 %v1410
    %v1451 = vunpack.c.h.b16 %v1410
    %v1452 = vunpack.c.l.b16 %v1411
    %v1453 = vunpack.c.h.b16 %v1411
    %v1454 = vunpack.c.l.b16 %v1412
    %v1455 = vunpack.c.h.b16 %v1412
    %v1456 = vunpack.c.l.b16 %v1413
    %v1457 = vunpack.c.h.b16 %v1413
    %v1458 = vunpack.c.l.b16 %v1414
    %v1459 = vunpack.c.h.b16 %v1414
    %v1460 = vunpack.c.l.b16 %v1415
    %v1461 = vunpack.c.h.b16 %v1415
    %v1462 = vunpack.c.l.b16 %v1416
    %v1463 = vunpack.c.h.b16 %v1416
    %v1464 = vunpack.c.l.b16 %v1417
    %v1465 = vunpack.c.h.b16 %v1417
    %v1466 = vunpack.c.l.b16 %v1418
    %v1467 = vunpack.c.h.b16 %v1418
    %v1468 = vunpack.c.l.b16 %v1419
    %v1469 = vunpack.c.h.b16 %v1419
    %v1470 = vunpack.c.l.b16 %v1420
    %v1471 = vunpack.c.h.b16 %v1420
    %v1472 = vunpack.c.l.b16 %v1421
    %v1473 = vunpack.c.h.b16 %v1421
    %v1474 = vunpack.c.l.b16 %v1422
    %v1475 = vunpack.c.h.b16 %v1422
    %v1476 = vunpack.c.l.b16 %v1423
    %v1477 = vunpack.c.h.b16 %v1423
    %v1478 = vpack.c.b16 %v1448, %v1446
    %v1479 = vpack.c.b16 %v1449, %v1447
    %v1480 = vpack.c.b16 %v1452, %v1450
    %v1481 = vpack.c.b16 %v1453, %v1451
    %v1482 = vpack.c.b16 %v1456, %v1454
    %v1483 = vpack.c.b16 %v1457, %v1455
    %v1484 = vpack.c.b16 %v1460, %v1458
    %v1485 = vpack.c.b16 %v1461, %v1459
    %v1486 = vpack.c.b16 %v1464, %v1462
    %v1487 = vpack.c.b16 %v1465, %v1463
    %v1488 = vpack.c.b16 %v1468, %v1466
    %v1489 = vpack.c.b16 %v1469, %v1467
    %v1490 = vpack.c.b16 %v1472, %v1470
    %v1491 = vpack.c.b16 %v1473, %v1471
    %v1492 = vpack.c.b16 %v1476, %v1474
    %v1493 = vpack.c.b16 %v1477, %v1475
    %1510 = vmatpush.bf16.msra.mxu0 %v1492
    %1511 = vmatpush.bf16.msra.mxu0 %v1490
    %1512 = vmatpush.bf16.msra.mxu0 %v1488
    %1513 = vmatpush.bf16.msra.mxu0 %v1486
    %1514 = vmatpush.bf16.msra.mxu0 %v1484
    %1515 = vmatpush.bf16.msra.mxu0 %v1482
    %1516 = vmatpush.bf16.msra.mxu0 %v1480
    %1517 = vmatpush.bf16.msra.mxu0 %v1478
    %1518 = vmatmul.bf16.gmra.mxu0 %v1407
    %v1519 = vpop.f32.mrf.mxu0
    %v1520 = vadd.f32 %v1426, %v1519
    %v1521 = vpop.f32.mrf.mxu0
    %v1522 = vadd.f32 %v1426, %v1521
    %1523 = vdwg.mxu0
    %1524 = vmatpush.bf16.msra.mxu0 %v1493
    %1525 = vmatpush.bf16.msra.mxu0 %v1491
    %1526 = vmatpush.bf16.msra.mxu0 %v1489
    %1527 = vmatpush.bf16.msra.mxu0 %v1487
    %1528 = vmatpush.bf16.msra.mxu0 %v1485
    %1529 = vmatpush.bf16.msra.mxu0 %v1483
    %1530 = vmatpush.bf16.msra.mxu0 %v1481
    %1531 = vmatpush.bf16.msra.mxu0 %v1479
    %1532 = vmatmul.bf16.gmra.mxu0 %v1407
    %v1533 = vpop.f32.mrf.mxu0
    %v1534 = vadd.f32 %v1427, %v1533
    %v1535 = vpop.f32.mrf.mxu0
    %v1536 = vadd.f32 %v1427, %v1535
    %1537 = vdwg.mxu0
    %v1538 = vmul.f32 %v1534, 0.5
    %v1539 = vmul.f32 %v1536, 0.5
    %v1540 = vmul.f32 %v1538, 1.442695
    %v1541 = vpow.pop %v1540
    %v1542 = vmul.f32 %v1539, 1.442695
    %v1543 = vpow.pop %v1542
    %v1544 = vld [vmem:[#allocation5] sm:$0xff]
    %v1545 = vld [vmem:[#allocation5 + $0x8] sm:$0xff]
    %v1546 = vmul.f32 %v1544, %v1541
    %v1547 = vmul.f32 %v1545, %v1543
    %v1548 = vadd.f32 %v1520, %v1546
    %v1549 = vadd.f32 %v1522, %v1547
    %v1550 = vpack.c.bf16 %v1549, %v1548
    %v1551 = vld [vmem:[#allocation14] sm:$0xf]
    %v1552 = vld [vmem:[#allocation14 + $0x4] sm:$0xf]
    %v1553 = vld [vmem:[#allocation14 + $0x8] sm:$0xf]
    %v1554 = vld [vmem:[#allocation14 + $0xc] sm:$0xf]
    %v1555 = vld [vmem:[#allocation14 + $0x10] sm:$0xf]
    %v1556 = vld [vmem:[#allocation14 + $0x14] sm:$0xf]
    %v1557 = vld [vmem:[#allocation14 + $0x18] sm:$0xf]
    %v1558 = vld [vmem:[#allocation14 + $0x1c] sm:$0xf]
    %v1559 = vld [vmem:[#allocation14 + $0x20] sm:$0xf]
    %v1560 = vld [vmem:[#allocation14 + $0x24] sm:$0xf]
    %v1561 = vld [vmem:[#allocation14 + $0x28] sm:$0xf]
    %v1562 = vld [vmem:[#allocation14 + $0x2c] sm:$0xf]
    %v1563 = vld [vmem:[#allocation14 + $0x30] sm:$0xf]
    %v1564 = vld [vmem:[#allocation14 + $0x34] sm:$0xf]
    %v1565 = vld [vmem:[#allocation14 + $0x38] sm:$0xf]
    %v1566 = vld [vmem:[#allocation14 + $0x3c] sm:$0xf]
    %v1567 = vld [vmem:[#allocation16] sm:$0x1]
    %v1569 = vperm.slane %v1567, 0
    %v1587 = vunpack.c.l.b16 %v1551
    %v1588 = vunpack.c.l.b16 %v1552
    %v1589 = vunpack.c.l.b16 %v1553
    %v1590 = vunpack.c.l.b16 %v1554
    %v1591 = vunpack.c.l.b16 %v1555
    %v1592 = vunpack.c.l.b16 %v1556
    %v1593 = vunpack.c.l.b16 %v1557
    %v1594 = vunpack.c.l.b16 %v1558
    %v1595 = vunpack.c.l.b16 %v1559
    %v1596 = vunpack.c.l.b16 %v1560
    %v1597 = vunpack.c.l.b16 %v1561
    %v1598 = vunpack.c.l.b16 %v1562
    %v1599 = vunpack.c.l.b16 %v1563
    %v1600 = vunpack.c.l.b16 %v1564
    %v1601 = vunpack.c.l.b16 %v1565
    %v1602 = vunpack.c.l.b16 %v1566
    %v1603 = vpack.c.b16 %v1588, %v1587
    %v1604 = vpack.c.b16 %v1590, %v1589
    %v1605 = vpack.c.b16 %v1592, %v1591
    %v1606 = vpack.c.b16 %v1594, %v1593
    %v1607 = vpack.c.b16 %v1596, %v1595
    %v1608 = vpack.c.b16 %v1598, %v1597
    %v1609 = vpack.c.b16 %v1600, %v1599
    %v1610 = vpack.c.b16 %v1602, %v1601
    %1619 = vmatpush.bf16.msra.mxu0 %v1610
    %1620 = vmatpush.bf16.msra.mxu0 %v1609
    %1621 = vmatpush.bf16.msra.mxu0 %v1608
    %1622 = vmatpush.bf16.msra.mxu0 %v1607
    %1623 = vmatpush.bf16.msra.mxu0 %v1606
    %1624 = vmatpush.bf16.msra.mxu0 %v1605
    %1625 = vmatpush.bf16.msra.mxu0 %v1604
    %1626 = vmatpush.bf16.msra.mxu0 %v1603
    %1627 = vmatmul.bf16.gmra.mxu0 %v1550
    %v1628 = vpop.f32.mrf.mxu0
    %v1629 = vadd.f32 %v1569, %v1628
    %v1630 = vpop.f32.mrf.mxu0
    %v1631 = vadd.f32 %v1569, %v1630
    %1632 = vdwg.mxu0
    %v1633 = vmul.f32 %v1629, 0.01
    %v1634 = vmul.f32 %v1631, 0.01
    %v1635 = vmax.f32 %v1629, %v1633
    %v1636 = vmax.f32 %v1631, %v1634
    %v1637 = vpack.c.bf16 %v1636, %v1635
    %v1638 = vld [vmem:[#allocation17] sm:$0xff]
    %v1639 = vld [vmem:[#allocation17 + $0x8] sm:$0xff]
    %v1640 = vld [vmem:[#allocation17 + $0x10] sm:$0xff]
    %v1641 = vld [vmem:[#allocation17 + $0x18] sm:$0xff]
    %v1642 = vld [vmem:[#allocation17 + $0x20] sm:$0xff]
    %v1643 = vld [vmem:[#allocation17 + $0x28] sm:$0xff]
    %v1644 = vld [vmem:[#allocation17 + $0x30] sm:$0xff]
    %v1645 = vld [vmem:[#allocation17 + $0x38] sm:$0xff]
    %v1646 = vld [vmem:[#allocation17 + $0x40] sm:$0xff]
    %v1647 = vld [vmem:[#allocation17 + $0x48] sm:$0xff]
    %v1648 = vld [vmem:[#allocation17 + $0x50] sm:$0xff]
    %v1649 = vld [vmem:[#allocation17 + $0x58] sm:$0xff]
    %v1650 = vld [vmem:[#allocation17 + $0x60] sm:$0xff]
    %v1651 = vld [vmem:[#allocation17 + $0x68] sm:$0xff]
    %v1652 = vld [vmem:[#allocation17 + $0x70] sm:$0xff]
    %v1653 = vld [vmem:[#allocation17 + $0x78] sm:$0xff]
    %v1654 = vld [vmem:[#allocation17 + $0x80] sm:$0xff]
    %v1655 = vld [vmem:[#allocation17 + $0x88] sm:$0xff]
    %v1656 = vld [vmem:[#allocation17 + $0x90] sm:$0xff]
    %v1657 = vld [vmem:[#allocation17 + $0x98] sm:$0xff]
    %v1658 = vld [vmem:[#allocation17 + $0xa0] sm:$0xff]
    %v1659 = vld [vmem:[#allocation17 + $0xa8] sm:$0xff]
    %v1660 = vld [vmem:[#allocation17 + $0xb0] sm:$0xff]
    %v1661 = vld [vmem:[#allocation17 + $0xb8] sm:$0xff]
    %v1662 = vld [vmem:[#allocation17 + $0xc0] sm:$0xff]
    %v1663 = vld [vmem:[#allocation17 + $0xc8] sm:$0xff]
    %v1664 = vld [vmem:[#allocation17 + $0xd0] sm:$0xff]
    %v1665 = vld [vmem:[#allocation17 + $0xd8] sm:$0xff]
    %v1666 = vld [vmem:[#allocation17 + $0xe0] sm:$0xff]
    %v1667 = vld [vmem:[#allocation17 + $0xe8] sm:$0xff]
    %v1668 = vld [vmem:[#allocation17 + $0xf0] sm:$0xff]
    %v1669 = vld [vmem:[#allocation17 + $0xf8] sm:$0xff]
    %v1670 = vld [vmem:[#allocation17 + $0x100] sm:$0xff]
    %v1671 = vld [vmem:[#allocation17 + $0x108] sm:$0xff]
    %v1672 = vld [vmem:[#allocation17 + $0x110] sm:$0xff]
    %v1673 = vld [vmem:[#allocation17 + $0x118] sm:$0xff]
    %v1674 = vld [vmem:[#allocation17 + $0x120] sm:$0xff]
    %v1675 = vld [vmem:[#allocation17 + $0x128] sm:$0xff]
    %v1676 = vld [vmem:[#allocation17 + $0x130] sm:$0xff]
    %v1677 = vld [vmem:[#allocation17 + $0x138] sm:$0xff]
    %v1678 = vld [vmem:[#allocation17 + $0x140] sm:$0xff]
    %v1679 = vld [vmem:[#allocation17 + $0x148] sm:$0xff]
    %v1680 = vld [vmem:[#allocation17 + $0x150] sm:$0xff]
    %v1681 = vld [vmem:[#allocation17 + $0x158] sm:$0xff]
    %v1682 = vld [vmem:[#allocation17 + $0x160] sm:$0xff]
    %v1683 = vld [vmem:[#allocation17 + $0x168] sm:$0xff]
    %v1684 = vld [vmem:[#allocation17 + $0x170] sm:$0xff]
    %v1685 = vld [vmem:[#allocation17 + $0x178] sm:$0xff]
    %v1686 = vld [vmem:[#allocation17 + $0x180] sm:$0xff]
    %v1687 = vld [vmem:[#allocation17 + $0x188] sm:$0xff]
    %v1688 = vld [vmem:[#allocation17 + $0x190] sm:$0xff]
    %v1689 = vld [vmem:[#allocation17 + $0x198] sm:$0xff]
    %v1690 = vld [vmem:[#allocation17 + $0x1a0] sm:$0xff]
    %v1691 = vld [vmem:[#allocation17 + $0x1a8] sm:$0xff]
    %v1692 = vld [vmem:[#allocation17 + $0x1b0] sm:$0xff]
    %v1693 = vld [vmem:[#allocation17 + $0x1b8] sm:$0xff]
    %v1694 = vld [vmem:[#allocation17 + $0x1c0] sm:$0xff]
    %v1695 = vld [vmem:[#allocation17 + $0x1c8] sm:$0xff]
    %v1696 = vld [vmem:[#allocation17 + $0x1d0] sm:$0xff]
    %v1697 = vld [vmem:[#allocation17 + $0x1d8] sm:$0xff]
    %v1698 = vld [vmem:[#allocation17 + $0x1e0] sm:$0xff]
    %v1699 = vld [vmem:[#allocation17 + $0x1e8] sm:$0xff]
    %v1700 = vld [vmem:[#allocation17 + $0x1f0] sm:$0xff]
    %v1701 = vld [vmem:[#allocation17 + $0x1f8] sm:$0xff]
    %v1702 = vld [vmem:[%s11] sm:$0xff]
    %v1704 = vperm.slane %v1702, 0
    %v1705 = vperm.slane %v1702, 1
    %v1706 = vperm.slane %v1702, 2
    %v1707 = vperm.slane %v1702, 3
    %v1708 = vperm.slane %v1702, 4
    %v1709 = vperm.slane %v1702, 5
    %v1710 = vperm.slane %v1702, 6
    %v1711 = vperm.slane %v1702, 7
    %v1784 = vunpack.c.l.b16 %v1638
    %v1785 = vunpack.c.h.b16 %v1638
    %v1786 = vunpack.c.l.b16 %v1639
    %v1787 = vunpack.c.h.b16 %v1639
    %v1788 = vunpack.c.l.b16 %v1640
    %v1789 = vunpack.c.h.b16 %v1640
    %v1790 = vunpack.c.l.b16 %v1641
    %v1791 = vunpack.c.h.b16 %v1641
    %v1792 = vunpack.c.l.b16 %v1642
    %v1793 = vunpack.c.h.b16 %v1642
    %v1794 = vunpack.c.l.b16 %v1643
    %v1795 = vunpack.c.h.b16 %v1643
    %v1796 = vunpack.c.l.b16 %v1644
    %v1797 = vunpack.c.h.b16 %v1644
    %v1798 = vunpack.c.l.b16 %v1645
    %v1799 = vunpack.c.h.b16 %v1645
    %v1800 = vunpack.c.l.b16 %v1646
    %v1801 = vunpack.c.h.b16 %v1646
    %v1802 = vunpack.c.l.b16 %v1647
    %v1803 = vunpack.c.h.b16 %v1647
    %v1804 = vunpack.c.l.b16 %v1648
    %v1805 = vunpack.c.h.b16 %v1648
    %v1806 = vunpack.c.l.b16 %v1649
    %v1807 = vunpack.c.h.b16 %v1649
    %v1808 = vunpack.c.l.b16 %v1650
    %v1809 = vunpack.c.h.b16 %v1650
    %v1810 = vunpack.c.l.b16 %v1651
    %v1811 = vunpack.c.h.b16 %v1651
    %v1812 = vunpack.c.l.b16 %v1652
    %v1813 = vunpack.c.h.b16 %v1652
    %v1814 = vunpack.c.l.b16 %v1653
    %v1815 = vunpack.c.h.b16 %v1653
    %v1816 = vunpack.c.l.b16 %v1654
    %v1817 = vunpack.c.h.b16 %v1654
    %v1818 = vunpack.c.l.b16 %v1655
    %v1819 = vunpack.c.h.b16 %v1655
    %v1820 = vunpack.c.l.b16 %v1656
    %v1821 = vunpack.c.h.b16 %v1656
    %v1822 = vunpack.c.l.b16 %v1657
    %v1823 = vunpack.c.h.b16 %v1657
    %v1824 = vunpack.c.l.b16 %v1658
    %v1825 = vunpack.c.h.b16 %v1658
    %v1826 = vunpack.c.l.b16 %v1659
    %v1827 = vunpack.c.h.b16 %v1659
    %v1828 = vunpack.c.l.b16 %v1660
    %v1829 = vunpack.c.h.b16 %v1660
    %v1830 = vunpack.c.l.b16 %v1661
    %v1831 = vunpack.c.h.b16 %v1661
    %v1832 = vunpack.c.l.b16 %v1662
    %v1833 = vunpack.c.h.b16 %v1662
    %v1834 = vunpack.c.l.b16 %v1663
    %v1835 = vunpack.c.h.b16 %v1663
    %v1836 = vunpack.c.l.b16 %v1664
    %v1837 = vunpack.c.h.b16 %v1664
    %v1838 = vunpack.c.l.b16 %v1665
    %v1839 = vunpack.c.h.b16 %v1665
    %v1840 = vunpack.c.l.b16 %v1666
    %v1841 = vunpack.c.h.b16 %v1666
    %v1842 = vunpack.c.l.b16 %v1667
    %v1843 = vunpack.c.h.b16 %v1667
    %v1844 = vunpack.c.l.b16 %v1668
    %v1845 = vunpack.c.h.b16 %v1668
    %v1846 = vunpack.c.l.b16 %v1669
    %v1847 = vunpack.c.h.b16 %v1669
    %v1848 = vunpack.c.l.b16 %v1670
    %v1849 = vunpack.c.h.b16 %v1670
    %v1850 = vunpack.c.l.b16 %v1671
    %v1851 = vunpack.c.h.b16 %v1671
    %v1852 = vunpack.c.l.b16 %v1672
    %v1853 = vunpack.c.h.b16 %v1672
    %v1854 = vunpack.c.l.b16 %v1673
    %v1855 = vunpack.c.h.b16 %v1673
    %v1856 = vunpack.c.l.b16 %v1674
    %v1857 = vunpack.c.h.b16 %v1674
    %v1858 = vunpack.c.l.b16 %v1675
    %v1859 = vunpack.c.h.b16 %v1675
    %v1860 = vunpack.c.l.b16 %v1676
    %v1861 = vunpack.c.h.b16 %v1676
    %v1862 = vunpack.c.l.b16 %v1677
    %v1863 = vunpack.c.h.b16 %v1677
    %v1864 = vunpack.c.l.b16 %v1678
    %v1865 = vunpack.c.h.b16 %v1678
    %v1866 = vunpack.c.l.b16 %v1679
    %v1867 = vunpack.c.h.b16 %v1679
    %v1868 = vunpack.c.l.b16 %v1680
    %v1869 = vunpack.c.h.b16 %v1680
    %v1870 = vunpack.c.l.b16 %v1681
    %v1871 = vunpack.c.h.b16 %v1681
    %v1872 = vunpack.c.l.b16 %v1682
    %v1873 = vunpack.c.h.b16 %v1682
    %v1874 = vunpack.c.l.b16 %v1683
    %v1875 = vunpack.c.h.b16 %v1683
    %v1876 = vunpack.c.l.b16 %v1684
    %v1877 = vunpack.c.h.b16 %v1684
    %v1878 = vunpack.c.l.b16 %v1685
    %v1879 = vunpack.c.h.b16 %v1685
    %v1880 = vunpack.c.l.b16 %v1686
    %v1881 = vunpack.c.h.b16 %v1686
    %v1882 = vunpack.c.l.b16 %v1687
    %v1883 = vunpack.c.h.b16 %v1687
    %v1884 = vunpack.c.l.b16 %v1688
    %v1885 = vunpack.c.h.b16 %v1688
    %v1886 = vunpack.c.l.b16 %v1689
    %v1887 = vunpack.c.h.b16 %v1689
    %v1888 = vunpack.c.l.b16 %v1690
    %v1889 = vunpack.c.h.b16 %v1690
    %v1890 = vunpack.c.l.b16 %v1691
    %v1891 = vunpack.c.h.b16 %v1691
    %v1892 = vunpack.c.l.b16 %v1692
    %v1893 = vunpack.c.h.b16 %v1692
    %v1894 = vunpack.c.l.b16 %v1693
    %v1895 = vunpack.c.h.b16 %v1693
    %v1896 = vunpack.c.l.b16 %v1694
    %v1897 = vunpack.c.h.b16 %v1694
    %v1898 = vunpack.c.l.b16 %v1695
    %v1899 = vunpack.c.h.b16 %v1695
    %v1900 = vunpack.c.l.b16 %v1696
    %v1901 = vunpack.c.h.b16 %v1696
    %v1902 = vunpack.c.l.b16 %v1697
    %v1903 = vunpack.c.h.b16 %v1697
    %v1904 = vunpack.c.l.b16 %v1698
    %v1905 = vunpack.c.h.b16 %v1698
    %v1906 = vunpack.c.l.b16 %v1699
    %v1907 = vunpack.c.h.b16 %v1699
    %v1908 = vunpack.c.l.b16 %v1700
    %v1909 = vunpack.c.h.b16 %v1700
    %v1910 = vunpack.c.l.b16 %v1701
    %v1911 = vunpack.c.h.b16 %v1701
    %v1912 = vpack.c.b16 %v1792, %v1784
    %v1913 = vpack.c.b16 %v1793, %v1785
    %v1914 = vpack.c.b16 %v1794, %v1786
    %v1915 = vpack.c.b16 %v1795, %v1787
    %v1916 = vpack.c.b16 %v1796, %v1788
    %v1917 = vpack.c.b16 %v1797, %v1789
    %v1918 = vpack.c.b16 %v1798, %v1790
    %v1919 = vpack.c.b16 %v1799, %v1791
    %v1920 = vpack.c.b16 %v1808, %v1800
    %v1921 = vpack.c.b16 %v1809, %v1801
    %v1922 = vpack.c.b16 %v1810, %v1802
    %v1923 = vpack.c.b16 %v1811, %v1803
    %v1924 = vpack.c.b16 %v1812, %v1804
    %v1925 = vpack.c.b16 %v1813, %v1805
    %v1926 = vpack.c.b16 %v1814, %v1806
    %v1927 = vpack.c.b16 %v1815, %v1807
    %v1928 = vpack.c.b16 %v1824, %v1816
    %v1929 = vpack.c.b16 %v1825, %v1817
    %v1930 = vpack.c.b16 %v1826, %v1818
    %v1931 = vpack.c.b16 %v1827, %v1819
    %v1932 = vpack.c.b16 %v1828, %v1820
    %v1933 = vpack.c.b16 %v1829, %v1821
    %v1934 = vpack.c.b16 %v1830, %v1822
    %v1935 = vpack.c.b16 %v1831, %v1823
    %v1936 = vpack.c.b16 %v1840, %v1832
    %v1937 = vpack.c.b16 %v1841, %v1833
    %v1938 = vpack.c.b16 %v1842, %v1834
    %v1939 = vpack.c.b16 %v1843, %v1835
    %v1940 = vpack.c.b16 %v1844, %v1836
    %v1941 = vpack.c.b16 %v1845, %v1837
    %v1942 = vpack.c.b16 %v1846, %v1838
    %v1943 = vpack.c.b16 %v1847, %v1839
    %v1944 = vpack.c.b16 %v1856, %v1848
    %v1945 = vpack.c.b16 %v1857, %v1849
    %v1946 = vpack.c.b16 %v1858, %v1850
    %v1947 = vpack.c.b16 %v1859, %v1851
    %v1948 = vpack.c.b16 %v1860, %v1852
    %v1949 = vpack.c.b16 %v1861, %v1853
    %v1950 = vpack.c.b16 %v1862, %v1854
    %v1951 = vpack.c.b16 %v1863, %v1855
    %v1952 = vpack.c.b16 %v1872, %v1864
    %v1953 = vpack.c.b16 %v1873, %v1865
    %v1954 = vpack.c.b16 %v1874, %v1866
    %v1955 = vpack.c.b16 %v1875, %v1867
    %v1956 = vpack.c.b16 %v1876, %v1868
    %v1957 = vpack.c.b16 %v1877, %v1869
    %v1958 = vpack.c.b16 %v1878, %v1870
    %v1959 = vpack.c.b16 %v1879, %v1871
    %v1960 = vpack.c.b16 %v1888, %v1880
    %v1961 = vpack.c.b16 %v1889, %v1881
    %v1962 = vpack.c.b16 %v1890, %v1882
    %v1963 = vpack.c.b16 %v1891, %v1883
    %v1964 = vpack.c.b16 %v1892, %v1884
    %v1965 = vpack.c.b16 %v1893, %v1885
    %v1966 = vpack.c.b16 %v1894, %v1886
    %v1967 = vpack.c.b16 %v1895, %v1887
    %v1968 = vpack.c.b16 %v1904, %v1896
    %v1969 = vpack.c.b16 %v1905, %v1897
    %v1970 = vpack.c.b16 %v1906, %v1898
    %v1971 = vpack.c.b16 %v1907, %v1899
    %v1972 = vpack.c.b16 %v1908, %v1900
    %v1973 = vpack.c.b16 %v1909, %v1901
    %v1974 = vpack.c.b16 %v1910, %v1902
    %v1975 = vpack.c.b16 %v1911, %v1903
    %2040 = vmatpush.bf16.msra.mxu0 %v1968
    %2041 = vmatpush.bf16.msra.mxu0 %v1960
    %2042 = vmatpush.bf16.msra.mxu0 %v1952
    %2043 = vmatpush.bf16.msra.mxu0 %v1944
    %2044 = vmatpush.bf16.msra.mxu0 %v1936
    %2045 = vmatpush.bf16.msra.mxu0 %v1928
    %2046 = vmatpush.bf16.msra.mxu0 %v1920
    %2047 = vmatpush.bf16.msra.mxu0 %v1912
    %2048 = vmatmul.bf16.gmra.mxu0 %v1637
    %v2049 = vpop.f32.mrf.mxu0
    %v2050 = vadd.f32 %v1704, %v2049
    %v2051 = vpop.f32.mrf.mxu0
    %v2052 = vadd.f32 %v1704, %v2051
    %2053 = vdwg.mxu0
    %2054 = vmatpush.bf16.msra.mxu0 %v1969
    %2055 = vmatpush.bf16.msra.mxu0 %v1961
    %2056 = vmatpush.bf16.msra.mxu0 %v1953
    %2057 = vmatpush.bf16.msra.mxu0 %v1945
    %2058 = vmatpush.bf16.msra.mxu0 %v1937
    %2059 = vmatpush.bf16.msra.mxu0 %v1929
    %2060 = vmatpush.bf16.msra.mxu0 %v1921
    %2061 = vmatpush.bf16.msra.mxu0 %v1913
    %2062 = vmatmul.bf16.gmra.mxu0 %v1637
    %v2063 = vpop.f32.mrf.mxu0
    %v2064 = vadd.f32 %v1705, %v2063
    %v2065 = vpop.f32.mrf.mxu0
    %v2066 = vadd.f32 %v1705, %v2065
    %2067 = vdwg.mxu0
    %2068 = vmatpush.bf16.msra.mxu0 %v1970
    %2069 = vmatpush.bf16.msra.mxu0 %v1962
    %2070 = vmatpush.bf16.msra.mxu0 %v1954
    %2071 = vmatpush.bf16.msra.mxu0 %v1946
    %2072 = vmatpush.bf16.msra.mxu0 %v1938
    %2073 = vmatpush.bf16.msra.mxu0 %v1930
    %2074 = vmatpush.bf16.msra.mxu0 %v1922
    %2075 = vmatpush.bf16.msra.mxu0 %v1914
    %2076 = vmatmul.bf16.gmra.mxu0 %v1637
    %v2077 = vpop.f32.mrf.mxu0
    %v2078 = vadd.f32 %v1706, %v2077
    %v2079 = vpop.f32.mrf.mxu0
    %v2080 = vadd.f32 %v1706, %v2079
    %2081 = vdwg.mxu0
    %2082 = vmatpush.bf16.msra.mxu0 %v1971
    %2083 = vmatpush.bf16.msra.mxu0 %v1963
    %2084 = vmatpush.bf16.msra.mxu0 %v1955
    %2085 = vmatpush.bf16.msra.mxu0 %v1947
    %2086 = vmatpush.bf16.msra.mxu0 %v1939
    %2087 = vmatpush.bf16.msra.mxu0 %v1931
    %2088 = vmatpush.bf16.msra.mxu0 %v1923
    %2089 = vmatpush.bf16.msra.mxu0 %v1915
    %2090 = vmatmul.bf16.gmra.mxu0 %v1637
    %v2091 = vpop.f32.mrf.mxu0
    %v2092 = vadd.f32 %v1707, %v2091
    %v2093 = vpop.f32.mrf.mxu0
    %v2094 = vadd.f32 %v1707, %v2093
    %2095 = vdwg.mxu0
    %2096 = vmatpush.bf16.msra.mxu0 %v1972
    %2097 = vmatpush.bf16.msra.mxu0 %v1964
    %2098 = vmatpush.bf16.msra.mxu0 %v1956
    %2099 = vmatpush.bf16.msra.mxu0 %v1948
    %2100 = vmatpush.bf16.msra.mxu0 %v1940
    %2101 = vmatpush.bf16.msra.mxu0 %v1932
    %2102 = vmatpush.bf16.msra.mxu0 %v1924
    %2103 = vmatpush.bf16.msra.mxu0 %v1916
    %2104 = vmatmul.bf16.gmra.mxu0 %v1637
    %v2105 = vpop.f32.mrf.mxu0
    %v2106 = vadd.f32 %v1708, %v2105
    %v2107 = vpop.f32.mrf.mxu0
    %v2108 = vadd.f32 %v1708, %v2107
    %2109 = vdwg.mxu0
    %2110 = vmatpush.bf16.msra.mxu0 %v1973
    %2111 = vmatpush.bf16.msra.mxu0 %v1965
    %2112 = vmatpush.bf16.msra.mxu0 %v1957
    %2113 = vmatpush.bf16.msra.mxu0 %v1949
    %2114 = vmatpush.bf16.msra.mxu0 %v1941
    %2115 = vmatpush.bf16.msra.mxu0 %v1933
    %2116 = vmatpush.bf16.msra.mxu0 %v1925
    %2117 = vmatpush.bf16.msra.mxu0 %v1917
    %2118 = vmatmul.bf16.gmra.mxu0 %v1637
    %v2119 = vpop.f32.mrf.mxu0
    %v2120 = vadd.f32 %v1709, %v2119
    %v2121 = vpop.f32.mrf.mxu0
    %v2122 = vadd.f32 %v1709, %v2121
    %2123 = vdwg.mxu0
    %2124 = vmatpush.bf16.msra.mxu0 %v1974
    %2125 = vmatpush.bf16.msra.mxu0 %v1966
    %2126 = vmatpush.bf16.msra.mxu0 %v1958
    %2127 = vmatpush.bf16.msra.mxu0 %v1950
    %2128 = vmatpush.bf16.msra.mxu0 %v1942
    %2129 = vmatpush.bf16.msra.mxu0 %v1934
    %2130 = vmatpush.bf16.msra.mxu0 %v1926
    %2131 = vmatpush.bf16.msra.mxu0 %v1918
    %2132 = vmatmul.bf16.gmra.mxu0 %v1637
    %v2133 = vpop.f32.mrf.mxu0
    %v2134 = vadd.f32 %v1710, %v2133
    %v2135 = vpop.f32.mrf.mxu0
    %v2136 = vadd.f32 %v1710, %v2135
    %2137 = vdwg.mxu0
    %2138 = vmatpush.bf16.msra.mxu0 %v1975
    %2139 = vmatpush.bf16.msra.mxu0 %v1967
    %2140 = vmatpush.bf16.msra.mxu0 %v1959
    %2141 = vmatpush.bf16.msra.mxu0 %v1951
    %2142 = vmatpush.bf16.msra.mxu0 %v1943
    %2143 = vmatpush.bf16.msra.mxu0 %v1935
    %2144 = vmatpush.bf16.msra.mxu0 %v1927
    %2145 = vmatpush.bf16.msra.mxu0 %v1919
    %2146 = vmatmul.bf16.gmra.mxu0 %v1637
    %v2147 = vpop.f32.mrf.mxu0
    %v2148 = vadd.f32 %v1711, %v2147
    %v2149 = vpop.f32.mrf.mxu0
    %v2150 = vadd.f32 %v1711, %v2149
    %2151 = vdwg.mxu0
    %v2152 = vmul.f32 %v2050, 0.01
    %v2153 = vmul.f32 %v2064, 0.01
    %v2154 = vmul.f32 %v2078, 0.01
    %v2155 = vmul.f32 %v2092, 0.01
    %v2156 = vmul.f32 %v2106, 0.01
    %v2157 = vmul.f32 %v2120, 0.01
    %v2158 = vmul.f32 %v2134, 0.01
    %v2159 = vmul.f32 %v2148, 0.01
    %v2160 = vmul.f32 %v2052, 0.01
    %v2161 = vmul.f32 %v2066, 0.01
    %v2162 = vmul.f32 %v2080, 0.01
    %v2163 = vmul.f32 %v2094, 0.01
    %v2164 = vmul.f32 %v2108, 0.01
    %v2165 = vmul.f32 %v2122, 0.01
    %v2166 = vmul.f32 %v2136, 0.01
    %v2167 = vmul.f32 %v2150, 0.01
    %v2168 = vmax.f32 %v2050, %v2152
    %v2169 = vmax.f32 %v2064, %v2153
    %v2170 = vmax.f32 %v2078, %v2154
    %v2171 = vmax.f32 %v2092, %v2155
    %v2172 = vmax.f32 %v2106, %v2156
    %v2173 = vmax.f32 %v2120, %v2157
    %v2174 = vmax.f32 %v2134, %v2158
    %v2175 = vmax.f32 %v2148, %v2159
    %v2176 = vmax.f32 %v2052, %v2160
    %v2177 = vmax.f32 %v2066, %v2161
    %v2178 = vmax.f32 %v2080, %v2162
    %v2179 = vmax.f32 %v2094, %v2163
    %v2180 = vmax.f32 %v2108, %v2164
    %v2181 = vmax.f32 %v2122, %v2165
    %v2182 = vmax.f32 %v2136, %v2166
    %v2183 = vmax.f32 %v2150, %v2167
    %v2184 = vpack.c.bf16 %v2176, %v2168
    %v2185 = vpack.c.bf16 %v2177, %v2169
    %v2186 = vpack.c.bf16 %v2178, %v2170
    %v2187 = vpack.c.bf16 %v2179, %v2171
    %v2188 = vpack.c.bf16 %v2180, %v2172
    %v2189 = vpack.c.bf16 %v2181, %v2173
    %v2190 = vpack.c.bf16 %v2182, %v2174
    %v2191 = vpack.c.bf16 %v2183, %v2175
    %v2192 = vld [vmem:[#allocation19] sm:$0xf]
    %v2193 = vld [vmem:[#allocation19 + $0x4] sm:$0xf]
    %v2194 = vld [vmem:[#allocation19 + $0x8] sm:$0xf]
    %v2195 = vld [vmem:[#allocation19 + $0xc] sm:$0xf]
    %v2196 = vld [vmem:[#allocation19 + $0x10] sm:$0xf]
    %v2197 = vld [vmem:[#allocation19 + $0x14] sm:$0xf]
    %v2198 = vld [vmem:[#allocation19 + $0x18] sm:$0xf]
    %v2199 = vld [vmem:[#allocation19 + $0x1c] sm:$0xf]
    %v2200 = vld [vmem:[#allocation19 + $0x20] sm:$0xf]
    %v2201 = vld [vmem:[#allocation19 + $0x24] sm:$0xf]
    %v2202 = vld [vmem:[#allocation19 + $0x28] sm:$0xf]
    %v2203 = vld [vmem:[#allocation19 + $0x2c] sm:$0xf]
    %v2204 = vld [vmem:[#allocation19 + $0x30] sm:$0xf]
    %v2205 = vld [vmem:[#allocation19 + $0x34] sm:$0xf]
    %v2206 = vld [vmem:[#allocation19 + $0x38] sm:$0xf]
    %v2207 = vld [vmem:[#allocation19 + $0x3c] sm:$0xf]
    %v2208 = vld [vmem:[#allocation19 + $0x40] sm:$0xf]
    %v2209 = vld [vmem:[#allocation19 + $0x44] sm:$0xf]
    %v2210 = vld [vmem:[#allocation19 + $0x48] sm:$0xf]
    %v2211 = vld [vmem:[#allocation19 + $0x4c] sm:$0xf]
    %v2212 = vld [vmem:[#allocation19 + $0x50] sm:$0xf]
    %v2213 = vld [vmem:[#allocation19 + $0x54] sm:$0xf]
    %v2214 = vld [vmem:[#allocation19 + $0x58] sm:$0xf]
    %v2215 = vld [vmem:[#allocation19 + $0x5c] sm:$0xf]
    %v2216 = vld [vmem:[#allocation19 + $0x60] sm:$0xf]
    %v2217 = vld [vmem:[#allocation19 + $0x64] sm:$0xf]
    %v2218 = vld [vmem:[#allocation19 + $0x68] sm:$0xf]
    %v2219 = vld [vmem:[#allocation19 + $0x6c] sm:$0xf]
    %v2220 = vld [vmem:[#allocation19 + $0x70] sm:$0xf]
    %v2221 = vld [vmem:[#allocation19 + $0x74] sm:$0xf]
    %v2222 = vld [vmem:[#allocation19 + $0x78] sm:$0xf]
    %v2223 = vld [vmem:[#allocation19 + $0x7c] sm:$0xf]
    %v2224 = vld [vmem:[#allocation19 + $0x80] sm:$0xf]
    %v2225 = vld [vmem:[#allocation19 + $0x84] sm:$0xf]
    %v2226 = vld [vmem:[#allocation19 + $0x88] sm:$0xf]
    %v2227 = vld [vmem:[#allocation19 + $0x8c] sm:$0xf]
    %v2228 = vld [vmem:[#allocation19 + $0x90] sm:$0xf]
    %v2229 = vld [vmem:[#allocation19 + $0x94] sm:$0xf]
    %v2230 = vld [vmem:[#allocation19 + $0x98] sm:$0xf]
    %v2231 = vld [vmem:[#allocation19 + $0x9c] sm:$0xf]
    %v2232 = vld [vmem:[#allocation19 + $0xa0] sm:$0xf]
    %v2233 = vld [vmem:[#allocation19 + $0xa4] sm:$0xf]
    %v2234 = vld [vmem:[#allocation19 + $0xa8] sm:$0xf]
    %v2235 = vld [vmem:[#allocation19 + $0xac] sm:$0xf]
    %v2236 = vld [vmem:[#allocation19 + $0xb0] sm:$0xf]
    %v2237 = vld [vmem:[#allocation19 + $0xb4] sm:$0xf]
    %v2238 = vld [vmem:[#allocation19 + $0xb8] sm:$0xf]
    %v2239 = vld [vmem:[#allocation19 + $0xbc] sm:$0xf]
    %v2240 = vld [vmem:[#allocation19 + $0xc0] sm:$0xf]
    %v2241 = vld [vmem:[#allocation19 + $0xc4] sm:$0xf]
    %v2242 = vld [vmem:[#allocation19 + $0xc8] sm:$0xf]
    %v2243 = vld [vmem:[#allocation19 + $0xcc] sm:$0xf]
    %v2244 = vld [vmem:[#allocation19 + $0xd0] sm:$0xf]
    %v2245 = vld [vmem:[#allocation19 + $0xd4] sm:$0xf]
    %v2246 = vld [vmem:[#allocation19 + $0xd8] sm:$0xf]
    %v2247 = vld [vmem:[#allocation19 + $0xdc] sm:$0xf]
    %v2248 = vld [vmem:[#allocation19 + $0xe0] sm:$0xf]
    %v2249 = vld [vmem:[#allocation19 + $0xe4] sm:$0xf]
    %v2250 = vld [vmem:[#allocation19 + $0xe8] sm:$0xf]
    %v2251 = vld [vmem:[#allocation19 + $0xec] sm:$0xf]
    %v2252 = vld [vmem:[#allocation19 + $0xf0] sm:$0xf]
    %v2253 = vld [vmem:[#allocation19 + $0xf4] sm:$0xf]
    %v2254 = vld [vmem:[#allocation19 + $0xf8] sm:$0xf]
    %v2255 = vld [vmem:[#allocation19 + $0xfc] sm:$0xf]
    %v2256 = vld [vmem:[#allocation19 + $0x100] sm:$0xf]
    %v2257 = vld [vmem:[#allocation19 + $0x104] sm:$0xf]
    %v2258 = vld [vmem:[#allocation19 + $0x108] sm:$0xf]
    %v2259 = vld [vmem:[#allocation19 + $0x10c] sm:$0xf]
    %v2260 = vld [vmem:[#allocation19 + $0x110] sm:$0xf]
    %v2261 = vld [vmem:[#allocation19 + $0x114] sm:$0xf]
    %v2262 = vld [vmem:[#allocation19 + $0x118] sm:$0xf]
    %v2263 = vld [vmem:[#allocation19 + $0x11c] sm:$0xf]
    %v2264 = vld [vmem:[#allocation19 + $0x120] sm:$0xf]
    %v2265 = vld [vmem:[#allocation19 + $0x124] sm:$0xf]
    %v2266 = vld [vmem:[#allocation19 + $0x128] sm:$0xf]
    %v2267 = vld [vmem:[#allocation19 + $0x12c] sm:$0xf]
    %v2268 = vld [vmem:[#allocation19 + $0x130] sm:$0xf]
    %v2269 = vld [vmem:[#allocation19 + $0x134] sm:$0xf]
    %v2270 = vld [vmem:[#allocation19 + $0x138] sm:$0xf]
    %v2271 = vld [vmem:[#allocation19 + $0x13c] sm:$0xf]
    %v2272 = vld [vmem:[#allocation19 + $0x140] sm:$0xf]
    %v2273 = vld [vmem:[#allocation19 + $0x144] sm:$0xf]
    %v2274 = vld [vmem:[#allocation19 + $0x148] sm:$0xf]
    %v2275 = vld [vmem:[#allocation19 + $0x14c] sm:$0xf]
    %v2276 = vld [vmem:[#allocation19 + $0x150] sm:$0xf]
    %v2277 = vld [vmem:[#allocation19 + $0x154] sm:$0xf]
    %v2278 = vld [vmem:[#allocation19 + $0x158] sm:$0xf]
    %v2279 = vld [vmem:[#allocation19 + $0x15c] sm:$0xf]
    %v2280 = vld [vmem:[#allocation19 + $0x160] sm:$0xf]
    %v2281 = vld [vmem:[#allocation19 + $0x164] sm:$0xf]
    %v2282 = vld [vmem:[#allocation19 + $0x168] sm:$0xf]
    %v2283 = vld [vmem:[#allocation19 + $0x16c] sm:$0xf]
    %v2284 = vld [vmem:[#allocation19 + $0x170] sm:$0xf]
    %v2285 = vld [vmem:[#allocation19 + $0x174] sm:$0xf]
    %v2286 = vld [vmem:[#allocation19 + $0x178] sm:$0xf]
    %v2287 = vld [vmem:[#allocation19 + $0x17c] sm:$0xf]
    %v2288 = vld [vmem:[#allocation19 + $0x180] sm:$0xf]
    %v2289 = vld [vmem:[#allocation19 + $0x184] sm:$0xf]
    %v2290 = vld [vmem:[#allocation19 + $0x188] sm:$0xf]
    %v2291 = vld [vmem:[#allocation19 + $0x18c] sm:$0xf]
    %v2292 = vld [vmem:[#allocation19 + $0x190] sm:$0xf]
    %v2293 = vld [vmem:[#allocation19 + $0x194] sm:$0xf]
    %v2294 = vld [vmem:[#allocation19 + $0x198] sm:$0xf]
    %v2295 = vld [vmem:[#allocation19 + $0x19c] sm:$0xf]
    %v2296 = vld [vmem:[#allocation19 + $0x1a0] sm:$0xf]
    %v2297 = vld [vmem:[#allocation19 + $0x1a4] sm:$0xf]
    %v2298 = vld [vmem:[#allocation19 + $0x1a8] sm:$0xf]
    %v2299 = vld [vmem:[#allocation19 + $0x1ac] sm:$0xf]
    %v2300 = vld [vmem:[#allocation19 + $0x1b0] sm:$0xf]
    %v2301 = vld [vmem:[#allocation19 + $0x1b4] sm:$0xf]
    %v2302 = vld [vmem:[#allocation19 + $0x1b8] sm:$0xf]
    %v2303 = vld [vmem:[#allocation19 + $0x1bc] sm:$0xf]
    %v2304 = vld [vmem:[#allocation19 + $0x1c0] sm:$0xf]
    %v2305 = vld [vmem:[#allocation19 + $0x1c4] sm:$0xf]
    %v2306 = vld [vmem:[#allocation19 + $0x1c8] sm:$0xf]
    %v2307 = vld [vmem:[#allocation19 + $0x1cc] sm:$0xf]
    %v2308 = vld [vmem:[#allocation19 + $0x1d0] sm:$0xf]
    %v2309 = vld [vmem:[#allocation19 + $0x1d4] sm:$0xf]
    %v2310 = vld [vmem:[#allocation19 + $0x1d8] sm:$0xf]
    %v2311 = vld [vmem:[#allocation19 + $0x1dc] sm:$0xf]
    %v2312 = vld [vmem:[#allocation19 + $0x1e0] sm:$0xf]
    %v2313 = vld [vmem:[#allocation19 + $0x1e4] sm:$0xf]
    %v2314 = vld [vmem:[#allocation19 + $0x1e8] sm:$0xf]
    %v2315 = vld [vmem:[#allocation19 + $0x1ec] sm:$0xf]
    %v2316 = vld [vmem:[#allocation19 + $0x1f0] sm:$0xf]
    %v2317 = vld [vmem:[#allocation19 + $0x1f4] sm:$0xf]
    %v2318 = vld [vmem:[#allocation19 + $0x1f8] sm:$0xf]
    %v2319 = vld [vmem:[#allocation19 + $0x1fc] sm:$0xf]
    %v2320 = vld [vmem:[%s13] sm:$0x1]
    %v2322 = vperm.slane %v2320, 0
    %v2452 = vunpack.c.l.b16 %v2192
    %v2453 = vunpack.c.l.b16 %v2193
    %v2454 = vunpack.c.l.b16 %v2194
    %v2455 = vunpack.c.l.b16 %v2195
    %v2456 = vunpack.c.l.b16 %v2196
    %v2457 = vunpack.c.l.b16 %v2197
    %v2458 = vunpack.c.l.b16 %v2198
    %v2459 = vunpack.c.l.b16 %v2199
    %v2460 = vunpack.c.l.b16 %v2200
    %v2461 = vunpack.c.l.b16 %v2201
    %v2462 = vunpack.c.l.b16 %v2202
    %v2463 = vunpack.c.l.b16 %v2203
    %v2464 = vunpack.c.l.b16 %v2204
    %v2465 = vunpack.c.l.b16 %v2205
    %v2466 = vunpack.c.l.b16 %v2206
    %v2467 = vunpack.c.l.b16 %v2207
    %v2468 = vunpack.c.l.b16 %v2208
    %v2469 = vunpack.c.l.b16 %v2209
    %v2470 = vunpack.c.l.b16 %v2210
    %v2471 = vunpack.c.l.b16 %v2211
    %v2472 = vunpack.c.l.b16 %v2212
    %v2473 = vunpack.c.l.b16 %v2213
    %v2474 = vunpack.c.l.b16 %v2214
    %v2475 = vunpack.c.l.b16 %v2215
    %v2476 = vunpack.c.l.b16 %v2216
    %v2477 = vunpack.c.l.b16 %v2217
    %v2478 = vunpack.c.l.b16 %v2218
    %v2479 = vunpack.c.l.b16 %v2219
    %v2480 = vunpack.c.l.b16 %v2220
    %v2481 = vunpack.c.l.b16 %v2221
    %v2482 = vunpack.c.l.b16 %v2222
    %v2483 = vunpack.c.l.b16 %v2223
    %v2484 = vunpack.c.l.b16 %v2224
    %v2485 = vunpack.c.l.b16 %v2225
    %v2486 = vunpack.c.l.b16 %v2226
    %v2487 = vunpack.c.l.b16 %v2227
    %v2488 = vunpack.c.l.b16 %v2228
    %v2489 = vunpack.c.l.b16 %v2229
    %v2490 = vunpack.c.l.b16 %v2230
    %v2491 = vunpack.c.l.b16 %v2231
    %v2492 = vunpack.c.l.b16 %v2232
    %v2493 = vunpack.c.l.b16 %v2233
    %v2494 = vunpack.c.l.b16 %v2234
    %v2495 = vunpack.c.l.b16 %v2235
    %v2496 = vunpack.c.l.b16 %v2236
    %v2497 = vunpack.c.l.b16 %v2237
    %v2498 = vunpack.c.l.b16 %v2238
    %v2499 = vunpack.c.l.b16 %v2239
    %v2500 = vunpack.c.l.b16 %v2240
    %v2501 = vunpack.c.l.b16 %v2241
    %v2502 = vunpack.c.l.b16 %v2242
    %v2503 = vunpack.c.l.b16 %v2243
    %v2504 = vunpack.c.l.b16 %v2244
    %v2505 = vunpack.c.l.b16 %v2245
    %v2506 = vunpack.c.l.b16 %v2246
    %v2507 = vunpack.c.l.b16 %v2247
    %v2508 = vunpack.c.l.b16 %v2248
    %v2509 = vunpack.c.l.b16 %v2249
    %v2510 = vunpack.c.l.b16 %v2250
    %v2511 = vunpack.c.l.b16 %v2251
    %v2512 = vunpack.c.l.b16 %v2252
    %v2513 = vunpack.c.l.b16 %v2253
    %v2514 = vunpack.c.l.b16 %v2254
    %v2515 = vunpack.c.l.b16 %v2255
    %v2516 = vunpack.c.l.b16 %v2256
    %v2517 = vunpack.c.l.b16 %v2257
    %v2518 = vunpack.c.l.b16 %v2258
    %v2519 = vunpack.c.l.b16 %v2259
    %v2520 = vunpack.c.l.b16 %v2260
    %v2521 = vunpack.c.l.b16 %v2261
    %v2522 = vunpack.c.l.b16 %v2262
    %v2523 = vunpack.c.l.b16 %v2263
    %v2524 = vunpack.c.l.b16 %v2264
    %v2525 = vunpack.c.l.b16 %v2265
    %v2526 = vunpack.c.l.b16 %v2266
    %v2527 = vunpack.c.l.b16 %v2267
    %v2528 = vunpack.c.l.b16 %v2268
    %v2529 = vunpack.c.l.b16 %v2269
    %v2530 = vunpack.c.l.b16 %v2270
    %v2531 = vunpack.c.l.b16 %v2271
    %v2532 = vunpack.c.l.b16 %v2272
    %v2533 = vunpack.c.l.b16 %v2273
    %v2534 = vunpack.c.l.b16 %v2274
    %v2535 = vunpack.c.l.b16 %v2275
    %v2536 = vunpack.c.l.b16 %v2276
    %v2537 = vunpack.c.l.b16 %v2277
    %v2538 = vunpack.c.l.b16 %v2278
    %v2539 = vunpack.c.l.b16 %v2279
    %v2540 = vunpack.c.l.b16 %v2280
    %v2541 = vunpack.c.l.b16 %v2281
    %v2542 = vunpack.c.l.b16 %v2282
    %v2543 = vunpack.c.l.b16 %v2283
    %v2544 = vunpack.c.l.b16 %v2284
    %v2545 = vunpack.c.l.b16 %v2285
    %v2546 = vunpack.c.l.b16 %v2286
    %v2547 = vunpack.c.l.b16 %v2287
    %v2548 = vunpack.c.l.b16 %v2288
    %v2549 = vunpack.c.l.b16 %v2289
    %v2550 = vunpack.c.l.b16 %v2290
    %v2551 = vunpack.c.l.b16 %v2291
    %v2552 = vunpack.c.l.b16 %v2292
    %v2553 = vunpack.c.l.b16 %v2293
    %v2554 = vunpack.c.l.b16 %v2294
    %v2555 = vunpack.c.l.b16 %v2295
    %v2556 = vunpack.c.l.b16 %v2296
    %v2557 = vunpack.c.l.b16 %v2297
    %v2558 = vunpack.c.l.b16 %v2298
    %v2559 = vunpack.c.l.b16 %v2299
    %v2560 = vunpack.c.l.b16 %v2300
    %v2561 = vunpack.c.l.b16 %v2301
    %v2562 = vunpack.c.l.b16 %v2302
    %v2563 = vunpack.c.l.b16 %v2303
    %v2564 = vunpack.c.l.b16 %v2304
    %v2565 = vunpack.c.l.b16 %v2305
    %v2566 = vunpack.c.l.b16 %v2306
    %v2567 = vunpack.c.l.b16 %v2307
    %v2568 = vunpack.c.l.b16 %v2308
    %v2569 = vunpack.c.l.b16 %v2309
    %v2570 = vunpack.c.l.b16 %v2310
    %v2571 = vunpack.c.l.b16 %v2311
    %v2572 = vunpack.c.l.b16 %v2312
    %v2573 = vunpack.c.l.b16 %v2313
    %v2574 = vunpack.c.l.b16 %v2314
    %v2575 = vunpack.c.l.b16 %v2315
    %v2576 = vunpack.c.l.b16 %v2316
    %v2577 = vunpack.c.l.b16 %v2317
    %v2578 = vunpack.c.l.b16 %v2318
    %v2579 = vunpack.c.l.b16 %v2319
    %v2580 = vpack.c.b16 %v2453, %v2452
    %v2581 = vpack.c.b16 %v2455, %v2454
    %v2582 = vpack.c.b16 %v2457, %v2456
    %v2583 = vpack.c.b16 %v2459, %v2458
    %v2584 = vpack.c.b16 %v2461, %v2460
    %v2585 = vpack.c.b16 %v2463, %v2462
    %v2586 = vpack.c.b16 %v2465, %v2464
    %v2587 = vpack.c.b16 %v2467, %v2466
    %v2588 = vpack.c.b16 %v2469, %v2468
    %v2589 = vpack.c.b16 %v2471, %v2470
    %v2590 = vpack.c.b16 %v2473, %v2472
    %v2591 = vpack.c.b16 %v2475, %v2474
    %v2592 = vpack.c.b16 %v2477, %v2476
    %v2593 = vpack.c.b16 %v2479, %v2478
    %v2594 = vpack.c.b16 %v2481, %v2480
    %v2595 = vpack.c.b16 %v2483, %v2482
    %v2596 = vpack.c.b16 %v2485, %v2484
    %v2597 = vpack.c.b16 %v2487, %v2486
    %v2598 = vpack.c.b16 %v2489, %v2488
    %v2599 = vpack.c.b16 %v2491, %v2490
    %v2600 = vpack.c.b16 %v2493, %v2492
    %v2601 = vpack.c.b16 %v2495, %v2494
    %v2602 = vpack.c.b16 %v2497, %v2496
    %v2603 = vpack.c.b16 %v2499, %v2498
    %v2604 = vpack.c.b16 %v2501, %v2500
    %v2605 = vpack.c.b16 %v2503, %v2502
    %v2606 = vpack.c.b16 %v2505, %v2504
    %v2607 = vpack.c.b16 %v2507, %v2506
    %v2608 = vpack.c.b16 %v2509, %v2508
    %v2609 = vpack.c.b16 %v2511, %v2510
    %v2610 = vpack.c.b16 %v2513, %v2512
    %v2611 = vpack.c.b16 %v2515, %v2514
    %v2612 = vpack.c.b16 %v2517, %v2516
    %v2613 = vpack.c.b16 %v2519, %v2518
    %v2614 = vpack.c.b16 %v2521, %v2520
    %v2615 = vpack.c.b16 %v2523, %v2522
    %v2616 = vpack.c.b16 %v2525, %v2524
    %v2617 = vpack.c.b16 %v2527, %v2526
    %v2618 = vpack.c.b16 %v2529, %v2528
    %v2619 = vpack.c.b16 %v2531, %v2530
    %v2620 = vpack.c.b16 %v2533, %v2532
    %v2621 = vpack.c.b16 %v2535, %v2534
    %v2622 = vpack.c.b16 %v2537, %v2536
    %v2623 = vpack.c.b16 %v2539, %v2538
    %v2624 = vpack.c.b16 %v2541, %v2540
    %v2625 = vpack.c.b16 %v2543, %v2542
    %v2626 = vpack.c.b16 %v2545, %v2544
    %v2627 = vpack.c.b16 %v2547, %v2546
    %v2628 = vpack.c.b16 %v2549, %v2548
    %v2629 = vpack.c.b16 %v2551, %v2550
    %v2630 = vpack.c.b16 %v2553, %v2552
    %v2631 = vpack.c.b16 %v2555, %v2554
    %v2632 = vpack.c.b16 %v2557, %v2556
    %v2633 = vpack.c.b16 %v2559, %v2558
    %v2634 = vpack.c.b16 %v2561, %v2560
    %v2635 = vpack.c.b16 %v2563, %v2562
    %v2636 = vpack.c.b16 %v2565, %v2564
    %v2637 = vpack.c.b16 %v2567, %v2566
    %v2638 = vpack.c.b16 %v2569, %v2568
    %v2639 = vpack.c.b16 %v2571, %v2570
    %v2640 = vpack.c.b16 %v2573, %v2572
    %v2641 = vpack.c.b16 %v2575, %v2574
    %v2642 = vpack.c.b16 %v2577, %v2576
    %v2643 = vpack.c.b16 %v2579, %v2578
    %2708 = vmatpush.bf16.msra.mxu0 %v2587
    %2709 = vmatpush.bf16.msra.mxu0 %v2586
    %2710 = vmatpush.bf16.msra.mxu0 %v2585
    %2711 = vmatpush.bf16.msra.mxu0 %v2584
    %2712 = vmatpush.bf16.msra.mxu0 %v2583
    %2713 = vmatpush.bf16.msra.mxu0 %v2582
    %2714 = vmatpush.bf16.msra.mxu0 %v2581
    %2715 = vmatpush.bf16.msra.mxu0 %v2580
    %2716 = vmatmul.bf16.gmra.mxu0 %v2184
    %v2717 = vpop.f32.mrf.mxu0
    %v2718 = vadd.f32 %v2322, %v2717
    %v2719 = vpop.f32.mrf.mxu0
    %v2720 = vadd.f32 %v2322, %v2719
    %2721 = vdwg.mxu0
    %2722 = vmatpush.bf16.msra.mxu0 %v2595
    %2723 = vmatpush.bf16.msra.mxu0 %v2594
    %2724 = vmatpush.bf16.msra.mxu0 %v2593
    %2725 = vmatpush.bf16.msra.mxu0 %v2592
    %2726 = vmatpush.bf16.msra.mxu0 %v2591
    %2727 = vmatpush.bf16.msra.mxu0 %v2590
    %2728 = vmatpush.bf16.msra.mxu0 %v2589
    %2729 = vmatpush.bf16.msra.mxu0 %v2588
    %2730 = vmatmul.bf16.gmra.mxu0 %v2185
    %v2731 = vpop.f32.mrf.mxu0
    %v2732 = vadd.f32 %v2718, %v2731
    %v2733 = vpop.f32.mrf.mxu0
    %v2734 = vadd.f32 %v2720, %v2733
    %2735 = vdwg.mxu0
    %2736 = vmatpush.bf16.msra.mxu0 %v2603
    %2737 = vmatpush.bf16.msra.mxu0 %v2602
    %2738 = vmatpush.bf16.msra.mxu0 %v2601
    %2739 = vmatpush.bf16.msra.mxu0 %v2600
    %2740 = vmatpush.bf16.msra.mxu0 %v2599
    %2741 = vmatpush.bf16.msra.mxu0 %v2598
    %2742 = vmatpush.bf16.msra.mxu0 %v2597
    %2743 = vmatpush.bf16.msra.mxu0 %v2596
    %2744 = vmatmul.bf16.gmra.mxu0 %v2186
    %v2745 = vpop.f32.mrf.mxu0
    %v2746 = vadd.f32 %v2732, %v2745
    %v2747 = vpop.f32.mrf.mxu0
    %v2748 = vadd.f32 %v2734, %v2747
    %2749 = vdwg.mxu0
    %2750 = vmatpush.bf16.msra.mxu0 %v2611
    %2751 = vmatpush.bf16.msra.mxu0 %v2610
    %2752 = vmatpush.bf16.msra.mxu0 %v2609
    %2753 = vmatpush.bf16.msra.mxu0 %v2608
    %2754 = vmatpush.bf16.msra.mxu0 %v2607
    %2755 = vmatpush.bf16.msra.mxu0 %v2606
    %2756 = vmatpush.bf16.msra.mxu0 %v2605
    %2757 = vmatpush.bf16.msra.mxu0 %v2604
    %2758 = vmatmul.bf16.gmra.mxu0 %v2187
    %v2759 = vpop.f32.mrf.mxu0
    %v2760 = vadd.f32 %v2746, %v2759
    %v2761 = vpop.f32.mrf.mxu0
    %v2762 = vadd.f32 %v2748, %v2761
    %2763 = vdwg.mxu0
    %2764 = vmatpush.bf16.msra.mxu0 %v2619
    %2765 = vmatpush.bf16.msra.mxu0 %v2618
    %2766 = vmatpush.bf16.msra.mxu0 %v2617
    %2767 = vmatpush.bf16.msra.mxu0 %v2616
    %2768 = vmatpush.bf16.msra.mxu0 %v2615
    %2769 = vmatpush.bf16.msra.mxu0 %v2614
    %2770 = vmatpush.bf16.msra.mxu0 %v2613
    %2771 = vmatpush.bf16.msra.mxu0 %v2612
    %2772 = vmatmul.bf16.gmra.mxu0 %v2188
    %v2773 = vpop.f32.mrf.mxu0
    %v2774 = vadd.f32 %v2760, %v2773
    %v2775 = vpop.f32.mrf.mxu0
    %v2776 = vadd.f32 %v2762, %v2775
    %2777 = vdwg.mxu0
    %2778 = vmatpush.bf16.msra.mxu0 %v2627
    %2779 = vmatpush.bf16.msra.mxu0 %v2626
    %2780 = vmatpush.bf16.msra.mxu0 %v2625
    %2781 = vmatpush.bf16.msra.mxu0 %v2624
    %2782 = vmatpush.bf16.msra.mxu0 %v2623
    %2783 = vmatpush.bf16.msra.mxu0 %v2622
    %2784 = vmatpush.bf16.msra.mxu0 %v2621
    %2785 = vmatpush.bf16.msra.mxu0 %v2620
    %2786 = vmatmul.bf16.gmra.mxu0 %v2189
    %v2787 = vpop.f32.mrf.mxu0
    %v2788 = vadd.f32 %v2774, %v2787
    %v2789 = vpop.f32.mrf.mxu0
    %v2790 = vadd.f32 %v2776, %v2789
    %2791 = vdwg.mxu0
    %2792 = vmatpush.bf16.msra.mxu0 %v2635
    %2793 = vmatpush.bf16.msra.mxu0 %v2634
    %2794 = vmatpush.bf16.msra.mxu0 %v2633
    %2795 = vmatpush.bf16.msra.mxu0 %v2632
    %2796 = vmatpush.bf16.msra.mxu0 %v2631
    %2797 = vmatpush.bf16.msra.mxu0 %v2630
    %2798 = vmatpush.bf16.msra.mxu0 %v2629
    %2799 = vmatpush.bf16.msra.mxu0 %v2628
    %2800 = vmatmul.bf16.gmra.mxu0 %v2190
    %v2801 = vpop.f32.mrf.mxu0
    %v2802 = vadd.f32 %v2788, %v2801
    %v2803 = vpop.f32.mrf.mxu0
    %v2804 = vadd.f32 %v2790, %v2803
    %2805 = vdwg.mxu0
    %2806 = vmatpush.bf16.msra.mxu0 %v2643
    %2807 = vmatpush.bf16.msra.mxu0 %v2642
    %2808 = vmatpush.bf16.msra.mxu0 %v2641
    %2809 = vmatpush.bf16.msra.mxu0 %v2640
    %2810 = vmatpush.bf16.msra.mxu0 %v2639
    %2811 = vmatpush.bf16.msra.mxu0 %v2638
    %2812 = vmatpush.bf16.msra.mxu0 %v2637
    %2813 = vmatpush.bf16.msra.mxu0 %v2636
    %2814 = vmatmul.bf16.gmra.mxu0 %v2191
    %v2815 = vpop.f32.mrf.mxu0
    %v2816 = vadd.f32 %v2802, %v2815
    %v2817 = vpop.f32.mrf.mxu0
    %v2818 = vadd.f32 %v2804, %v2817
    %2819 = vdwg.mxu0
    %v2820 = vmax.f32 %v2816, 0.0
    %v2821 = vmax.f32 %v2818, 0.0
    %v2822 = vand.u32 2147483647, %v2816
    %v2823 = vand.u32 2147483647, %v2818
    %v2824 = vsub.f32 0.0, %v2822
    %v2825 = vsub.f32 0.0, %v2823
    %v2826 = vmul.f32 %v2824, 1.442695
    %v2827 = vpow.pop %v2826
    %v2828 = vmul.f32 %v2825, 1.442695
    %v2829 = vpow.pop %v2828
    %v2830 = vadd.f32 %v2827, 1.0
    %v2831 = vlog2.pop %v2830
    %v2832 = vmul.f32 %v2831, 0.6931472
    %v2833 = vmul.f32 -0.5, %v2827
    %v2834 = vadd.f32 %v2833, 1.0
    %v2835 = vmul.f32 %v2834, %v2827
    %v2836 = vand.u32 2147483647, %v2827
    %vm2837 = vcmp.lt.f32.partialorder %v2836, 0.0004427343
    %v2838 = vsel %vm2837, %v2835, %v2832
    %v2839 = vadd.f32 %v2829, 1.0
    %v2840 = vlog2.pop %v2839
    %v2841 = vmul.f32 %v2840, 0.6931472
    %v2842 = vmul.f32 -0.5, %v2829
    %v2843 = vadd.f32 %v2842, 1.0
    %v2844 = vmul.f32 %v2843, %v2829
    %v2845 = vand.u32 2147483647, %v2829
    %vm2846 = vcmp.lt.f32.partialorder %v2845, 0.0004427343
    %v2847 = vsel %vm2846, %v2844, %v2841
    %v2848 = vadd.f32 %v2820, %v2838
    %v2849 = vadd.f32 %v2821, %v2847
    %2850 = vst [vmem:[#allocation20] sm:$0xff] %v2848
    %2851 = vst [vmem:[#allocation20 + $0x8] sm:$0xff] %v2849
    // Predicated region
    $region102: #{tpu_custom_call.1} parent=1 // pred_check
      _
    $region103: #{tpu_custom_call.1} parent=1 // pred_check_branch
      %2853 = sbr.rel (0) target = $region105
    $region104: #{tpu_custom_call.1} parent=1 // pred_region
      %2855 = vsyncadd [#allocation4], 0
      %s2856 = sshll.u32 [#allocation20], 4
      %s2857 = int_to_ptr.vmem [resolvable:$true] %s2856
      %s2858 = sshll.u32 %s14, 4
      %s2859 = int_to_ptr.hbm [resolvable:$true] %s2858
      %2864 = dma.vmem_to_hbm [thread:$0]  %s2857, 256, %s2859, [#allocation4], 128, 128, 8
    $region105: #{tpu_custom_call.1} parent=1 // pred_fallthru
      _
    // Predicated region
    $region106: #{tpu_custom_call.1} parent=1 // pred_check
      _
    $region107: #{tpu_custom_call.1} parent=1 // pred_check_branch
      %2866 = sbr.rel (0) target = $region109
    $region108: #{tpu_custom_call.1} parent=1 // pred_region
      %2868 = dma.done [#allocation4], 256
    $region109: #{tpu_custom_call.1} parent=1 // pred_fallthru
      _
    %2869 = vsyncpa [#allocation3], 1
    %2870 = vsyncpa [#allocation6], 1
    %2871 = vsyncpa [#allocation9], 1
    %2872 = vsyncpa [#allocation12], 1
    %2873 = vsyncpa [#allocation15], 1
    %2874 = vsyncpa [#allocation18], 1
    %2875 = vsyncpa [#allocation4], 1

</llo_original>
